<compile_context>
chip_gen: v5e
topology: v5e:2x2
jax: 0.10.0
libtpu: 0.0.40
codegen_flags: <defaults>
</compile_context>

<pallas_src>
import math

import jax
import jax.numpy as jnp
from jax import lax
from jax.experimental import pallas as pl
from jax.experimental.pallas import tpu as pltpu

D_MODEL = 128
NHEAD = 8
HEAD_DIM = D_MODEL // NHEAD
LN_EPS = 1e-5


def _layernorm(x, gamma, beta):
    mu = jnp.mean(x, axis=-1, keepdims=True)
    var = jnp.mean((x - mu) ** 2, axis=-1, keepdims=True)
    return (x - mu) * lax.rsqrt(var + LN_EPS) * gamma + beta


def decoder_layer_kernel(
    x_ref,        # (Bt, S, D)   f32
    wqkv_ref,     # (D, 3D)      bf16   in_proj_weight.T
    bqkv_ref,     # (1, 3D)      f32
    wo_ref,       # (D, D)       bf16   out_proj.weight.T
    bo_ref,       # (1, D)       f32
    g1_ref, b1_ref,              # norm1 weight / bias (1, D) f32
    w12_ref,      # (D, D)       bf16   fused linear1.T @ linear2.T
    b12_ref,      # (1, D)       f32    fused FFN bias
    g2_ref, b2_ref,              # norm2 weight / bias (1, D) f32
    o_ref,        # (Bt, S, D)
    ctx_ref,      # VMEM scratch (Bt, S, D) bf16: per-head attention contexts
):
    Bt, S, D = x_ref.shape
    rows = Bt * S

    x = x_ref[...].reshape(rows, D)                       # f32, kept for residuals
    x_bf = x.astype(jnp.bfloat16)

    # ---- QKV projection: one (rows,128)@(128,384) bf16 matmul, f32 accumulation ----
    qkv = jnp.dot(x_bf, wqkv_ref[...],
                  preferred_element_type=jnp.float32) + bqkv_ref[...]
    qkv3 = qkv.reshape(Bt, S, 3 * D)

    scale = 1.0 / math.sqrt(HEAD_DIM)
    q = (qkv3[:, :, 0 * D:1 * D] * scale).astype(jnp.bfloat16)   # scale q once
    k = qkv3[:, :, 1 * D:2 * D].astype(jnp.bfloat16)
    v = qkv3[:, :, 2 * D:3 * D].astype(jnp.bfloat16)

    # ---- per-head attention, batched over the Bt batch elements in the tile ----
    for h in range(NHEAD):                                # static, unrolled
        lo, hi = h * HEAD_DIM, (h + 1) * HEAD_DIM
        qh = q[:, :, lo:hi]                               # (Bt, S, hd)
        kh = k[:, :, lo:hi]
        vh = v[:, :, lo:hi]
        s = jnp.einsum('bqd,bkd->bqk', qh, kh,
                       preferred_element_type=jnp.float32)        # (Bt, S, S)
        s = s - jnp.max(s, axis=-1, keepdims=True)
        p = jnp.exp(s)
        p = p * pl.reciprocal(jnp.sum(p, axis=-1, keepdims=True), approx=True)
        ctx = jnp.einsum('bqk,bkd->bqd', p.astype(jnp.bfloat16), vh,
                         preferred_element_type=jnp.float32)      # (Bt, S, hd)
        ctx_ref[:, :, lo:hi] = ctx.astype(jnp.bfloat16)

    # ---- output projection: single (rows,128)@(128,128) matmul, no concat ----
    attn = jnp.dot(ctx_ref[...].reshape(rows, D), wo_ref[...],
                   preferred_element_type=jnp.float32) + bo_ref[...]

    # ---- residual + norm1 (f32) ----
    x1 = _layernorm(x + attn, g1_ref[...], b1_ref[...])

    # ---- fused linear2(linear1(.)) : one bf16 matmul, f32 accumulation ----
    h2 = jnp.dot(x1.astype(jnp.bfloat16), w12_ref[...],
                 preferred_element_type=jnp.float32) + b12_ref[...]

    # ---- residual + norm2 (f32) ----
    out = _layernorm(x1 + h2, g2_ref[...], b2_ref[...])
    o_ref[...] = out.reshape(Bt, S, D).astype(o_ref.dtype)


def _pick_batch_tile(B, S, target_rows=256):
    """Largest divisor of B such that Bt*S <= target_rows (always >= 1)."""
    cap = min(B, max(1, target_rows // S))
    bt = 1
    for cand in range(cap, 0, -1):
        if B % cand == 0:
            bt = cand
            break
    # Prefer >= 2 grid steps (v7x has 2 TensorCores) when each step still feeds
    # the MXU with >= 128 rows.
    if B // bt == 1 and bt % 2 == 0 and (bt // 2) * S >= 128:
        bt //= 2
    return bt


@jax.jit
def simple_decoder_layer(x, params):
    B, S, D = x.shape
    assert D == D_MODEL
    wqkv, bqkv, wo, bo, g1, b1, w1, bl1, w2, bl2, g2, b2 = params

    # Fuse the two activation-free linears once, in f32 (exact up to rounding).
    w12 = w1 @ w2
    b12 = bl1 @ w2 + bl2

    # bf16 weights for the MXU (halves weight DMA bytes); accumulation stays f32.
    wqkv_b = wqkv.astype(jnp.bfloat16)
    wo_b = wo.astype(jnp.bfloat16)
    w12_b = w12.astype(jnp.bfloat16)

    bt = _pick_batch_tile(B, S)

    full = lambda shape: pl.BlockSpec(shape, lambda i: (0,) * len(shape))
    grid_spec = pltpu.PrefetchScalarGridSpec(
        num_scalar_prefetch=0,
        grid=(B // bt,),
        in_specs=[
            pl.BlockSpec((bt, S, D), lambda i: (i, 0, 0)),   # x
            full((D, 3 * D)), full((1, 3 * D)),              # qkv projection
            full((D, D)), full((1, D)),                      # out projection
            full((1, D)), full((1, D)),                      # norm1
            full((D, D)), full((1, D)),                      # fused linear1@linear2
            full((1, D)), full((1, D)),                      # norm2
        ],
        out_specs=pl.BlockSpec((bt, S, D), lambda i: (i, 0, 0)),
        scratch_shapes=[pltpu.VMEM((bt, S, D), jnp.bfloat16)],
    )
    return pl.pallas_call(
        decoder_layer_kernel,
        out_shape=jax.ShapeDtypeStruct((B, S, D), x.dtype),
        grid_spec=grid_spec,
        compiler_params=pltpu.CompilerParams(
            dimension_semantics=("parallel",),
            vmem_limit_bytes=32 * 1024 * 1024),
    )(x, wqkv_b, bqkv, wo_b, bo, g1, b1, w12_b, b12, g2, b2)


# ----------------------------- reference (pure f32 JAX) ----------------------
def reference_forward(x, params):
    wqkv, bqkv, wo, bo, g1, b1, w1, bl1, w2, bl2, g2, b2 = params
    D = D_MODEL

    def ln(v, g, b):
        mu = jnp.mean(v, axis=-1, keepdims=True)
        var = jnp.mean((v - mu) ** 2, axis=-1, keepdims=True)
        return (v - mu) / jnp.sqrt(var + LN_EPS) * g + b

    qkv = x @ wqkv + bqkv                                   # (B, S, 3D)
    q, k, v = qkv[..., :D], qkv[..., D:2 * D], qkv[..., 2 * D:]
    B, S, _ = x.shape
    qh = q.reshape(B, S, NHEAD, HEAD_DIM).transpose(0, 2, 1, 3)
    kh = k.reshape(B, S, NHEAD, HEAD_DIM).transpose(0, 2, 1, 3)
    vh = v.reshape(B, S, NHEAD, HEAD_DIM).transpose(0, 2, 1, 3)
    s = jnp.einsum("bhqd,bhkd->bhqk", qh, kh) / math.sqrt(HEAD_DIM)
    p = jax.nn.softmax(s, axis=-1)
    o = jnp.einsum("bhqk,bhkd->bhqd", p, vh).transpose(0, 2, 1, 3).reshape(B, S, D)
    attn = o @ wo + bo
    x1 = ln(x + attn, g1, b1)
    x2 = (x1 @ w1 + bl1) @ w2 + bl2
    return ln(x1 + x2, g2, b2)


def init_params(key):
    ks = jax.random.split(key, 6)
    D = D_MODEL
    scale = 0.05
    wqkv = scale * jax.random.normal(ks[0], (D, 3 * D), jnp.float32)
    bqkv = scale * jax.random.normal(ks[1], (1, 3 * D), jnp.float32)
    wo = scale * jax.random.normal(ks[2], (D, D), jnp.float32)
    bo = scale * jax.random.normal(ks[3], (1, D), jnp.float32)
    w1 = scale * jax.random.normal(ks[4], (D, D), jnp.float32)
    bl1 = jnp.zeros((1, D), jnp.float32)
    w2 = scale * jax.random.normal(ks[5], (D, D), jnp.float32)
    bl2 = jnp.zeros((1, D), jnp.float32)
    g1 = jnp.ones((1, D), jnp.float32)
    b1 = jnp.zeros((1, D), jnp.float32)
    g2 = jnp.ones((1, D), jnp.float32)
    b2 = jnp.zeros((1, D), jnp.float32)
    return (wqkv, bqkv, wo, bo, g1, b1, w1, bl1, w2, bl2, g2, b2)


if __name__ == "__main__":
    key = jax.random.PRNGKey(0)
    kx, kp = jax.random.split(key)
    B, S = 2, 8
    x = jax.random.normal(kx, (B, S, D_MODEL), jnp.float32)
    params = init_params(kp)

    out = simple_decoder_layer(x, params)
    out = jax.block_until_ready(out)

    ref = reference_forward(x, params)
    assert out.shape == (B, S, D_MODEL)
    # bf16 matmul operands (with f32 accumulation) vs. pure-f32 reference:
    # allow a bf16-appropriate tolerance.
    max_err = float(jnp.max(jnp.abs(out - ref)))
    assert max_err < 2e-2, max_err
    print("KERNEL_OK")
</pallas_src>

<mosaic_0001>
module attributes {stable_mosaic.version = 11 : i64} {
  func.func @decoder_layer_kernel(%arg0: i32, %arg1: memref<2x8x128xf32, #tpu.memory_space<vmem>>, %arg2: memref<128x384xbf16, #tpu.memory_space<vmem>>, %arg3: memref<1x384xf32, #tpu.memory_space<vmem>>, %arg4: memref<128x128xbf16, #tpu.memory_space<vmem>>, %arg5: memref<1x128xf32, #tpu.memory_space<vmem>>, %arg6: memref<1x128xf32, #tpu.memory_space<vmem>>, %arg7: memref<1x128xf32, #tpu.memory_space<vmem>>, %arg8: memref<128x128xbf16, #tpu.memory_space<vmem>>, %arg9: memref<1x128xf32, #tpu.memory_space<vmem>>, %arg10: memref<1x128xf32, #tpu.memory_space<vmem>>, %arg11: memref<1x128xf32, #tpu.memory_space<vmem>>, %arg12: memref<2x8x128xf32, #tpu.memory_space<vmem>>, %arg13: memref<2x8x128xbf16, #tpu.memory_space<vmem>>) attributes {dimension_semantics = [#tpu.dimension_semantics<parallel>], iteration_bounds = array<i64: 1>, scalar_prefetch = 0 : i64, scratch_operands = 1 : i64, tpu.core_type = #tpu.core_type<tc>, window_params = [{transform_indices = @transform_0, window_bounds = array<i64: 2, 8, 128>}, {pipeline_mode = #tpu.pipeline_mode<synchronous>, transform_indices = @transform_1, window_bounds = array<i64: 128, 384>}, {pipeline_mode = #tpu.pipeline_mode<synchronous>, transform_indices = @transform_2, window_bounds = array<i64: 1, 384>}, {pipeline_mode = #tpu.pipeline_mode<synchronous>, transform_indices = @transform_3, window_bounds = array<i64: 128, 128>}, {pipeline_mode = #tpu.pipeline_mode<synchronous>, transform_indices = @transform_4, window_bounds = array<i64: 1, 128>}, {pipeline_mode = #tpu.pipeline_mode<synchronous>, transform_indices = @transform_5, window_bounds = array<i64: 1, 128>}, {pipeline_mode = #tpu.pipeline_mode<synchronous>, transform_indices = @transform_6, window_bounds = array<i64: 1, 128>}, {pipeline_mode = #tpu.pipeline_mode<synchronous>, transform_indices = @transform_7, window_bounds = array<i64: 128, 128>}, {pipeline_mode = #tpu.pipeline_mode<synchronous>, transform_indices = @transform_8, window_bounds = array<i64: 1, 128>}, {pipeline_mode = #tpu.pipeline_mode<synchronous>, transform_indices = @transform_9, window_bounds = array<i64: 1, 128>}, {pipeline_mode = #tpu.pipeline_mode<synchronous>, transform_indices = @transform_10, window_bounds = array<i64: 1, 128>}, {transform_indices = @transform_11, window_bounds = array<i64: 2, 8, 128>}]} {
    %c0 = arith.constant 0 : index
    %c0_0 = arith.constant 0 : index
    %c0_1 = arith.constant 0 : index
    %0 = vector.load %arg1[%c0, %c0_0, %c0_1] : memref<2x8x128xf32, #tpu.memory_space<vmem>>, vector<2x8x128xf32>
    %1 = vector.shape_cast %0 : vector<2x8x128xf32> to vector<16x128xf32>
    %2 = arith.truncf %1 : vector<16x128xf32> to vector<16x128xbf16>
    %c0_2 = arith.constant 0 : index
    %c0_3 = arith.constant 0 : index
    %3 = vector.load %arg2[%c0_2, %c0_3] : memref<128x384xbf16, #tpu.memory_space<vmem>>, vector<128x384xbf16>
    %cst = arith.constant dense<0.000000e+00> : vector<16x384xf32>
    %4 = tpu.matmul %2, %3, %cst {dimension_numbers = #tpu.dot_dimension_numbers<[1], [0], [0], [1], [0, 0, 1, 1], [], []>} : vector<16x128xbf16>, vector<128x384xbf16>, vector<16x384xf32> -> vector<16x384xf32>
    %c0_4 = arith.constant 0 : index
    %c0_5 = arith.constant 0 : index
    %5 = vector.load %arg3[%c0_4, %c0_5] : memref<1x384xf32, #tpu.memory_space<vmem>>, vector<1x384xf32>
    %6 = vector.broadcast %5 : vector<1x384xf32> to vector<16x384xf32>
    %7 = arith.addf %4, %6 : vector<16x384xf32>
    %8 = vector.shape_cast %7 : vector<16x384xf32> to vector<2x8x384xf32>
    %9 = vector.extract_strided_slice %8 {offsets = [0, 0, 0], sizes = [2, 8, 128], strides = [1, 1, 1]} : vector<2x8x384xf32> to vector<2x8x128xf32>
    %cst_6 = arith.constant 2.500000e-01 : f32
    %10 = vector.broadcast %cst_6 : f32 to vector<2x8x128xf32>
    %11 = arith.mulf %9, %10 : vector<2x8x128xf32>
    %12 = arith.truncf %11 : vector<2x8x128xf32> to vector<2x8x128xbf16>
    %13 = vector.extract_strided_slice %8 {offsets = [0, 0, 128], sizes = [2, 8, 128], strides = [1, 1, 1]} : vector<2x8x384xf32> to vector<2x8x128xf32>
    %14 = arith.truncf %13 : vector<2x8x128xf32> to vector<2x8x128xbf16>
    %15 = vector.extract_strided_slice %8 {offsets = [0, 0, 256], sizes = [2, 8, 128], strides = [1, 1, 1]} : vector<2x8x384xf32> to vector<2x8x128xf32>
    %16 = arith.truncf %15 : vector<2x8x128xf32> to vector<2x8x128xbf16>
    %17 = vector.extract_strided_slice %12 {offsets = [0, 0, 0], sizes = [2, 8, 16], strides = [1, 1, 1]} : vector<2x8x128xbf16> to vector<2x8x16xbf16>
    %18 = vector.extract_strided_slice %14 {offsets = [0, 0, 0], sizes = [2, 8, 16], strides = [1, 1, 1]} : vector<2x8x128xbf16> to vector<2x8x16xbf16>
    %19 = vector.extract_strided_slice %16 {offsets = [0, 0, 0], sizes = [2, 8, 16], strides = [1, 1, 1]} : vector<2x8x128xbf16> to vector<2x8x16xbf16>
    "tpu.trace_start"() <{level = 10 : i32, message = "bqd,bkd->bqk"}> : () -> ()
    %cst_7 = arith.constant dense<0.000000e+00> : vector<2x8x8xf32>
    %20 = tpu.matmul %17, %18, %cst_7 {dimension_numbers = #tpu.dot_dimension_numbers<[2], [2], [1], [1], [0, 0, 0, 1, 1, 1], [0], [0]>} : vector<2x8x16xbf16>, vector<2x8x16xbf16>, vector<2x8x8xf32> -> vector<2x8x8xf32>
    "tpu.trace_stop"() : () -> ()
    %cst_8 = arith.constant dense<0xFF800000> : vector<2x8xf32>
    %21 = vector.multi_reduction <maximumf>, %20, %cst_8 [2] : vector<2x8x8xf32> to vector<2x8xf32>
    %22 = vector.shape_cast %21 : vector<2x8xf32> to vector<2x8x1xf32>
    %23 = vector.broadcast %22 : vector<2x8x1xf32> to vector<2x8x8xf32>
    %24 = arith.subf %20, %23 : vector<2x8x8xf32>
    %25 = math.exp %24 : vector<2x8x8xf32>
    %cst_9 = arith.constant dense<0.000000e+00> : vector<2x8xf32>
    %26 = vector.multi_reduction <add>, %25, %cst_9 [2] : vector<2x8x8xf32> to vector<2x8xf32>
    %27 = vector.shape_cast %26 : vector<2x8xf32> to vector<2x8x1xf32>
    %28 = tpu.reciprocal %27 {approx = true} : vector<2x8x1xf32> -> vector<2x8x1xf32>
    %29 = vector.broadcast %28 : vector<2x8x1xf32> to vector<2x8x8xf32>
    %30 = arith.mulf %25, %29 : vector<2x8x8xf32>
    %31 = arith.truncf %30 : vector<2x8x8xf32> to vector<2x8x8xbf16>
    "tpu.trace_start"() <{level = 10 : i32, message = "bqk,bkd->bqd"}> : () -> ()
    %cst_10 = arith.constant dense<0.000000e+00> : vector<2x8x16xf32>
    %32 = tpu.matmul %31, %19, %cst_10 {dimension_numbers = #tpu.dot_dimension_numbers<[2], [1], [1], [2], [0, 0, 0, 1, 1, 2], [0], [0]>} : vector<2x8x8xbf16>, vector<2x8x16xbf16>, vector<2x8x16xf32> -> vector<2x8x16xf32>
    "tpu.trace_stop"() : () -> ()
    %33 = arith.truncf %32 : vector<2x8x16xf32> to vector<2x8x16xbf16>
    %c0_11 = arith.constant 0 : index
    %c0_12 = arith.constant 0 : index
    %c0_13 = arith.constant 0 : index
    %34 = vector.load %arg13[%c0_11, %c0_12, %c0_13] : memref<2x8x128xbf16, #tpu.memory_space<vmem>>, vector<2x8x16xbf16>
    tpu.vector_store %arg13[%c0_11, %c0_12, %c0_13], %33 {strides = array<i32>} : memref<2x8x128xbf16, #tpu.memory_space<vmem>>, vector<2x8x16xbf16>,
    %35 = vector.extract_strided_slice %12 {offsets = [0, 0, 16], sizes = [2, 8, 16], strides = [1, 1, 1]} : vector<2x8x128xbf16> to vector<2x8x16xbf16>
    %36 = vector.extract_strided_slice %14 {offsets = [0, 0, 16], sizes = [2, 8, 16], strides = [1, 1, 1]} : vector<2x8x128xbf16> to vector<2x8x16xbf16>
    %37 = vector.extract_strided_slice %16 {offsets = [0, 0, 16], sizes = [2, 8, 16], strides = [1, 1, 1]} : vector<2x8x128xbf16> to vector<2x8x16xbf16>
    "tpu.trace_start"() <{level = 10 : i32, message = "bqd,bkd->bqk"}> : () -> ()
    %cst_14 = arith.constant dense<0.000000e+00> : vector<2x8x8xf32>
    %38 = tpu.matmul %35, %36, %cst_14 {dimension_numbers = #tpu.dot_dimension_numbers<[2], [2], [1], [1], [0, 0, 0, 1, 1, 1], [0], [0]>} : vector<2x8x16xbf16>, vector<2x8x16xbf16>, vector<2x8x8xf32> -> vector<2x8x8xf32>
    "tpu.trace_stop"() : () -> ()
    %cst_15 = arith.constant dense<0xFF800000> : vector<2x8xf32>
    %39 = vector.multi_reduction <maximumf>, %38, %cst_15 [2] : vector<2x8x8xf32> to vector<2x8xf32>
    %40 = vector.shape_cast %39 : vector<2x8xf32> to vector<2x8x1xf32>
    %41 = vector.broadcast %40 : vector<2x8x1xf32> to vector<2x8x8xf32>
    %42 = arith.subf %38, %41 : vector<2x8x8xf32>
    %43 = math.exp %42 : vector<2x8x8xf32>
    %cst_16 = arith.constant dense<0.000000e+00> : vector<2x8xf32>
    %44 = vector.multi_reduction <add>, %43, %cst_16 [2] : vector<2x8x8xf32> to vector<2x8xf32>
    %45 = vector.shape_cast %44 : vector<2x8xf32> to vector<2x8x1xf32>
    %46 = tpu.reciprocal %45 {approx = true} : vector<2x8x1xf32> -> vector<2x8x1xf32>
    %47 = vector.broadcast %46 : vector<2x8x1xf32> to vector<2x8x8xf32>
    %48 = arith.mulf %43, %47 : vector<2x8x8xf32>
    %49 = arith.truncf %48 : vector<2x8x8xf32> to vector<2x8x8xbf16>
    "tpu.trace_start"() <{level = 10 : i32, message = "bqk,bkd->bqd"}> : () -> ()
    %cst_17 = arith.constant dense<0.000000e+00> : vector<2x8x16xf32>
    %50 = tpu.matmul %49, %37, %cst_17 {dimension_numbers = #tpu.dot_dimension_numbers<[2], [1], [1], [2], [0, 0, 0, 1, 1, 2], [0], [0]>} : vector<2x8x8xbf16>, vector<2x8x16xbf16>, vector<2x8x16xf32> -> vector<2x8x16xf32>
    "tpu.trace_stop"() : () -> ()
    %51 = arith.truncf %50 : vector<2x8x16xf32> to vector<2x8x16xbf16>
    %c0_18 = arith.constant 0 : index
    %c0_19 = arith.constant 0 : index
    %c16 = arith.constant 16 : index
    %52 = vector.load %arg13[%c0_18, %c0_19, %c16] : memref<2x8x128xbf16, #tpu.memory_space<vmem>>, vector<2x8x16xbf16>
    tpu.vector_store %arg13[%c0_18, %c0_19, %c16], %51 {strides = array<i32>} : memref<2x8x128xbf16, #tpu.memory_space<vmem>>, vector<2x8x16xbf16>,
    %53 = vector.extract_strided_slice %12 {offsets = [0, 0, 32], sizes = [2, 8, 16], strides = [1, 1, 1]} : vector<2x8x128xbf16> to vector<2x8x16xbf16>
    %54 = vector.extract_strided_slice %14 {offsets = [0, 0, 32], sizes = [2, 8, 16], strides = [1, 1, 1]} : vector<2x8x128xbf16> to vector<2x8x16xbf16>
    %55 = vector.extract_strided_slice %16 {offsets = [0, 0, 32], sizes = [2, 8, 16], strides = [1, 1, 1]} : vector<2x8x128xbf16> to vector<2x8x16xbf16>
    "tpu.trace_start"() <{level = 10 : i32, message = "bqd,bkd->bqk"}> : () -> ()
    %cst_20 = arith.constant dense<0.000000e+00> : vector<2x8x8xf32>
    %56 = tpu.matmul %53, %54, %cst_20 {dimension_numbers = #tpu.dot_dimension_numbers<[2], [2], [1], [1], [0, 0, 0, 1, 1, 1], [0], [0]>} : vector<2x8x16xbf16>, vector<2x8x16xbf16>, vector<2x8x8xf32> -> vector<2x8x8xf32>
    "tpu.trace_stop"() : () -> ()
    %cst_21 = arith.constant dense<0xFF800000> : vector<2x8xf32>
    %57 = vector.multi_reduction <maximumf>, %56, %cst_21 [2] : vector<2x8x8xf32> to vector<2x8xf32>
    %58 = vector.shape_cast %57 : vector<2x8xf32> to vector<2x8x1xf32>
    %59 = vector.broadcast %58 : vector<2x8x1xf32> to vector<2x8x8xf32>
    %60 = arith.subf %56, %59 : vector<2x8x8xf32>
    %61 = math.exp %60 : vector<2x8x8xf32>
    %cst_22 = arith.constant dense<0.000000e+00> : vector<2x8xf32>
    %62 = vector.multi_reduction <add>, %61, %cst_22 [2] : vector<2x8x8xf32> to vector<2x8xf32>
    %63 = vector.shape_cast %62 : vector<2x8xf32> to vector<2x8x1xf32>
    %64 = tpu.reciprocal %63 {approx = true} : vector<2x8x1xf32> -> vector<2x8x1xf32>
    %65 = vector.broadcast %64 : vector<2x8x1xf32> to vector<2x8x8xf32>
    %66 = arith.mulf %61, %65 : vector<2x8x8xf32>
    %67 = arith.truncf %66 : vector<2x8x8xf32> to vector<2x8x8xbf16>
    "tpu.trace_start"() <{level = 10 : i32, message = "bqk,bkd->bqd"}> : () -> ()
    %cst_23 = arith.constant dense<0.000000e+00> : vector<2x8x16xf32>
    %68 = tpu.matmul %67, %55, %cst_23 {dimension_numbers = #tpu.dot_dimension_numbers<[2], [1], [1], [2], [0, 0, 0, 1, 1, 2], [0], [0]>} : vector<2x8x8xbf16>, vector<2x8x16xbf16>, vector<2x8x16xf32> -> vector<2x8x16xf32>
    "tpu.trace_stop"() : () -> ()
    %69 = arith.truncf %68 : vector<2x8x16xf32> to vector<2x8x16xbf16>
    %c0_24 = arith.constant 0 : index
    %c0_25 = arith.constant 0 : index
    %c32 = arith.constant 32 : index
    %70 = vector.load %arg13[%c0_24, %c0_25, %c32] : memref<2x8x128xbf16, #tpu.memory_space<vmem>>, vector<2x8x16xbf16>
    tpu.vector_store %arg13[%c0_24, %c0_25, %c32], %69 {strides = array<i32>} : memref<2x8x128xbf16, #tpu.memory_space<vmem>>, vector<2x8x16xbf16>,
    %71 = vector.extract_strided_slice %12 {offsets = [0, 0, 48], sizes = [2, 8, 16], strides = [1, 1, 1]} : vector<2x8x128xbf16> to vector<2x8x16xbf16>
    %72 = vector.extract_strided_slice %14 {offsets = [0, 0, 48], sizes = [2, 8, 16], strides = [1, 1, 1]} : vector<2x8x128xbf16> to vector<2x8x16xbf16>
    %73 = vector.extract_strided_slice %16 {offsets = [0, 0, 48], sizes = [2, 8, 16], strides = [1, 1, 1]} : vector<2x8x128xbf16> to vector<2x8x16xbf16>
    "tpu.trace_start"() <{level = 10 : i32, message = "bqd,bkd->bqk"}> : () -> ()
    %cst_26 = arith.constant dense<0.000000e+00> : vector<2x8x8xf32>
    %74 = tpu.matmul %71, %72, %cst_26 {dimension_numbers = #tpu.dot_dimension_numbers<[2], [2], [1], [1], [0, 0, 0, 1, 1, 1], [0], [0]>} : vector<2x8x16xbf16>, vector<2x8x16xbf16>, vector<2x8x8xf32> -> vector<2x8x8xf32>
    "tpu.trace_stop"() : () -> ()
    %cst_27 = arith.constant dense<0xFF800000> : vector<2x8xf32>
    %75 = vector.multi_reduction <maximumf>, %74, %cst_27 [2] : vector<2x8x8xf32> to vector<2x8xf32>
    %76 = vector.shape_cast %75 : vector<2x8xf32> to vector<2x8x1xf32>
    %77 = vector.broadcast %76 : vector<2x8x1xf32> to vector<2x8x8xf32>
    %78 = arith.subf %74, %77 : vector<2x8x8xf32>
    %79 = math.exp %78 : vector<2x8x8xf32>
    %cst_28 = arith.constant dense<0.000000e+00> : vector<2x8xf32>
    %80 = vector.multi_reduction <add>, %79, %cst_28 [2] : vector<2x8x8xf32> to vector<2x8xf32>
    %81 = vector.shape_cast %80 : vector<2x8xf32> to vector<2x8x1xf32>
    %82 = tpu.reciprocal %81 {approx = true} : vector<2x8x1xf32> -> vector<2x8x1xf32>
    %83 = vector.broadcast %82 : vector<2x8x1xf32> to vector<2x8x8xf32>
    %84 = arith.mulf %79, %83 : vector<2x8x8xf32>
    %85 = arith.truncf %84 : vector<2x8x8xf32> to vector<2x8x8xbf16>
    "tpu.trace_start"() <{level = 10 : i32, message = "bqk,bkd->bqd"}> : () -> ()
    %cst_29 = arith.constant dense<0.000000e+00> : vector<2x8x16xf32>
    %86 = tpu.matmul %85, %73, %cst_29 {dimension_numbers = #tpu.dot_dimension_numbers<[2], [1], [1], [2], [0, 0, 0, 1, 1, 2], [0], [0]>} : vector<2x8x8xbf16>, vector<2x8x16xbf16>, vector<2x8x16xf32> -> vector<2x8x16xf32>
    "tpu.trace_stop"() : () -> ()
    %87 = arith.truncf %86 : vector<2x8x16xf32> to vector<2x8x16xbf16>
    %c0_30 = arith.constant 0 : index
    %c0_31 = arith.constant 0 : index
    %c48 = arith.constant 48 : index
    %88 = vector.load %arg13[%c0_30, %c0_31, %c48] : memref<2x8x128xbf16, #tpu.memory_space<vmem>>, vector<2x8x16xbf16>
    tpu.vector_store %arg13[%c0_30, %c0_31, %c48], %87 {strides = array<i32>} : memref<2x8x128xbf16, #tpu.memory_space<vmem>>, vector<2x8x16xbf16>,
    %89 = vector.extract_strided_slice %12 {offsets = [0, 0, 64], sizes = [2, 8, 16], strides = [1, 1, 1]} : vector<2x8x128xbf16> to vector<2x8x16xbf16>
    %90 = vector.extract_strided_slice %14 {offsets = [0, 0, 64], sizes = [2, 8, 16], strides = [1, 1, 1]} : vector<2x8x128xbf16> to vector<2x8x16xbf16>
    %91 = vector.extract_strided_slice %16 {offsets = [0, 0, 64], sizes = [2, 8, 16], strides = [1, 1, 1]} : vector<2x8x128xbf16> to vector<2x8x16xbf16>
    "tpu.trace_start"() <{level = 10 : i32, message = "bqd,bkd->bqk"}> : () -> ()
    %cst_32 = arith.constant dense<0.000000e+00> : vector<2x8x8xf32>
    %92 = tpu.matmul %89, %90, %cst_32 {dimension_numbers = #tpu.dot_dimension_numbers<[2], [2], [1], [1], [0, 0, 0, 1, 1, 1], [0], [0]>} : vector<2x8x16xbf16>, vector<2x8x16xbf16>, vector<2x8x8xf32> -> vector<2x8x8xf32>
    "tpu.trace_stop"() : () -> ()
    %cst_33 = arith.constant dense<0xFF800000> : vector<2x8xf32>
    %93 = vector.multi_reduction <maximumf>, %92, %cst_33 [2] : vector<2x8x8xf32> to vector<2x8xf32>
    %94 = vector.shape_cast %93 : vector<2x8xf32> to vector<2x8x1xf32>
    %95 = vector.broadcast %94 : vector<2x8x1xf32> to vector<2x8x8xf32>
    %96 = arith.subf %92, %95 : vector<2x8x8xf32>
    %97 = math.exp %96 : vector<2x8x8xf32>
    %cst_34 = arith.constant dense<0.000000e+00> : vector<2x8xf32>
    %98 = vector.multi_reduction <add>, %97, %cst_34 [2] : vector<2x8x8xf32> to vector<2x8xf32>
    %99 = vector.shape_cast %98 : vector<2x8xf32> to vector<2x8x1xf32>
    %100 = tpu.reciprocal %99 {approx = true} : vector<2x8x1xf32> -> vector<2x8x1xf32>
    %101 = vector.broadcast %100 : vector<2x8x1xf32> to vector<2x8x8xf32>
    %102 = arith.mulf %97, %101 : vector<2x8x8xf32>
    %103 = arith.truncf %102 : vector<2x8x8xf32> to vector<2x8x8xbf16>
    "tpu.trace_start"() <{level = 10 : i32, message = "bqk,bkd->bqd"}> : () -> ()
    %cst_35 = arith.constant dense<0.000000e+00> : vector<2x8x16xf32>
    %104 = tpu.matmul %103, %91, %cst_35 {dimension_numbers = #tpu.dot_dimension_numbers<[2], [1], [1], [2], [0, 0, 0, 1, 1, 2], [0], [0]>} : vector<2x8x8xbf16>, vector<2x8x16xbf16>, vector<2x8x16xf32> -> vector<2x8x16xf32>
    "tpu.trace_stop"() : () -> ()
    %105 = arith.truncf %104 : vector<2x8x16xf32> to vector<2x8x16xbf16>
    %c0_36 = arith.constant 0 : index
    %c0_37 = arith.constant 0 : index
    %c64 = arith.constant 64 : index
    %106 = vector.load %arg13[%c0_36, %c0_37, %c64] : memref<2x8x128xbf16, #tpu.memory_space<vmem>>, vector<2x8x16xbf16>
    tpu.vector_store %arg13[%c0_36, %c0_37, %c64], %105 {strides = array<i32>} : memref<2x8x128xbf16, #tpu.memory_space<vmem>>, vector<2x8x16xbf16>,
    %107 = vector.extract_strided_slice %12 {offsets = [0, 0, 80], sizes = [2, 8, 16], strides = [1, 1, 1]} : vector<2x8x128xbf16> to vector<2x8x16xbf16>
    %108 = vector.extract_strided_slice %14 {offsets = [0, 0, 80], sizes = [2, 8, 16], strides = [1, 1, 1]} : vector<2x8x128xbf16> to vector<2x8x16xbf16>
    %109 = vector.extract_strided_slice %16 {offsets = [0, 0, 80], sizes = [2, 8, 16], strides = [1, 1, 1]} : vector<2x8x128xbf16> to vector<2x8x16xbf16>
    "tpu.trace_start"() <{level = 10 : i32, message = "bqd,bkd->bqk"}> : () -> ()
    %cst_38 = arith.constant dense<0.000000e+00> : vector<2x8x8xf32>
    %110 = tpu.matmul %107, %108, %cst_38 {dimension_numbers = #tpu.dot_dimension_numbers<[2], [2], [1], [1], [0, 0, 0, 1, 1, 1], [0], [0]>} : vector<2x8x16xbf16>, vector<2x8x16xbf16>, vector<2x8x8xf32> -> vector<2x8x8xf32>
    "tpu.trace_stop"() : () -> ()
    %cst_39 = arith.constant dense<0xFF800000> : vector<2x8xf32>
    %111 = vector.multi_reduction <maximumf>, %110, %cst_39 [2] : vector<2x8x8xf32> to vector<2x8xf32>
    %112 = vector.shape_cast %111 : vector<2x8xf32> to vector<2x8x1xf32>
    %113 = vector.broadcast %112 : vector<2x8x1xf32> to vector<2x8x8xf32>
    %114 = arith.subf %110, %113 : vector<2x8x8xf32>
    %115 = math.exp %114 : vector<2x8x8xf32>
    %cst_40 = arith.constant dense<0.000000e+00> : vector<2x8xf32>
    %116 = vector.multi_reduction <add>, %115, %cst_40 [2] : vector<2x8x8xf32> to vector<2x8xf32>
    %117 = vector.shape_cast %116 : vector<2x8xf32> to vector<2x8x1xf32>
    %118 = tpu.reciprocal %117 {approx = true} : vector<2x8x1xf32> -> vector<2x8x1xf32>
    %119 = vector.broadcast %118 : vector<2x8x1xf32> to vector<2x8x8xf32>
    %120 = arith.mulf %115, %119 : vector<2x8x8xf32>
    %121 = arith.truncf %120 : vector<2x8x8xf32> to vector<2x8x8xbf16>
    "tpu.trace_start"() <{level = 10 : i32, message = "bqk,bkd->bqd"}> : () -> ()
    %cst_41 = arith.constant dense<0.000000e+00> : vector<2x8x16xf32>
    %122 = tpu.matmul %121, %109, %cst_41 {dimension_numbers = #tpu.dot_dimension_numbers<[2], [1], [1], [2], [0, 0, 0, 1, 1, 2], [0], [0]>} : vector<2x8x8xbf16>, vector<2x8x16xbf16>, vector<2x8x16xf32> -> vector<2x8x16xf32>
    "tpu.trace_stop"() : () -> ()
    %123 = arith.truncf %122 : vector<2x8x16xf32> to vector<2x8x16xbf16>
    %c0_42 = arith.constant 0 : index
    %c0_43 = arith.constant 0 : index
    %c80 = arith.constant 80 : index
    %124 = vector.load %arg13[%c0_42, %c0_43, %c80] : memref<2x8x128xbf16, #tpu.memory_space<vmem>>, vector<2x8x16xbf16>
    tpu.vector_store %arg13[%c0_42, %c0_43, %c80], %123 {strides = array<i32>} : memref<2x8x128xbf16, #tpu.memory_space<vmem>>, vector<2x8x16xbf16>,
    %125 = vector.extract_strided_slice %12 {offsets = [0, 0, 96], sizes = [2, 8, 16], strides = [1, 1, 1]} : vector<2x8x128xbf16> to vector<2x8x16xbf16>
    %126 = vector.extract_strided_slice %14 {offsets = [0, 0, 96], sizes = [2, 8, 16], strides = [1, 1, 1]} : vector<2x8x128xbf16> to vector<2x8x16xbf16>
    %127 = vector.extract_strided_slice %16 {offsets = [0, 0, 96], sizes = [2, 8, 16], strides = [1, 1, 1]} : vector<2x8x128xbf16> to vector<2x8x16xbf16>
    "tpu.trace_start"() <{level = 10 : i32, message = "bqd,bkd->bqk"}> : () -> ()
    %cst_44 = arith.constant dense<0.000000e+00> : vector<2x8x8xf32>
    %128 = tpu.matmul %125, %126, %cst_44 {dimension_numbers = #tpu.dot_dimension_numbers<[2], [2], [1], [1], [0, 0, 0, 1, 1, 1], [0], [0]>} : vector<2x8x16xbf16>, vector<2x8x16xbf16>, vector<2x8x8xf32> -> vector<2x8x8xf32>
    "tpu.trace_stop"() : () -> ()
    %cst_45 = arith.constant dense<0xFF800000> : vector<2x8xf32>
    %129 = vector.multi_reduction <maximumf>, %128, %cst_45 [2] : vector<2x8x8xf32> to vector<2x8xf32>
    %130 = vector.shape_cast %129 : vector<2x8xf32> to vector<2x8x1xf32>
    %131 = vector.broadcast %130 : vector<2x8x1xf32> to vector<2x8x8xf32>
    %132 = arith.subf %128, %131 : vector<2x8x8xf32>
    %133 = math.exp %132 : vector<2x8x8xf32>
    %cst_46 = arith.constant dense<0.000000e+00> : vector<2x8xf32>
    %134 = vector.multi_reduction <add>, %133, %cst_46 [2] : vector<2x8x8xf32> to vector<2x8xf32>
    %135 = vector.shape_cast %134 : vector<2x8xf32> to vector<2x8x1xf32>
    %136 = tpu.reciprocal %135 {approx = true} : vector<2x8x1xf32> -> vector<2x8x1xf32>
    %137 = vector.broadcast %136 : vector<2x8x1xf32> to vector<2x8x8xf32>
    %138 = arith.mulf %133, %137 : vector<2x8x8xf32>
    %139 = arith.truncf %138 : vector<2x8x8xf32> to vector<2x8x8xbf16>
    "tpu.trace_start"() <{level = 10 : i32, message = "bqk,bkd->bqd"}> : () -> ()
    %cst_47 = arith.constant dense<0.000000e+00> : vector<2x8x16xf32>
    %140 = tpu.matmul %139, %127, %cst_47 {dimension_numbers = #tpu.dot_dimension_numbers<[2], [1], [1], [2], [0, 0, 0, 1, 1, 2], [0], [0]>} : vector<2x8x8xbf16>, vector<2x8x16xbf16>, vector<2x8x16xf32> -> vector<2x8x16xf32>
    "tpu.trace_stop"() : () -> ()
    %141 = arith.truncf %140 : vector<2x8x16xf32> to vector<2x8x16xbf16>
    %c0_48 = arith.constant 0 : index
    %c0_49 = arith.constant 0 : index
    %c96 = arith.constant 96 : index
    %142 = vector.load %arg13[%c0_48, %c0_49, %c96] : memref<2x8x128xbf16, #tpu.memory_space<vmem>>, vector<2x8x16xbf16>
    tpu.vector_store %arg13[%c0_48, %c0_49, %c96], %141 {strides = array<i32>} : memref<2x8x128xbf16, #tpu.memory_space<vmem>>, vector<2x8x16xbf16>,
    %143 = vector.extract_strided_slice %12 {offsets = [0, 0, 112], sizes = [2, 8, 16], strides = [1, 1, 1]} : vector<2x8x128xbf16> to vector<2x8x16xbf16>
    %144 = vector.extract_strided_slice %14 {offsets = [0, 0, 112], sizes = [2, 8, 16], strides = [1, 1, 1]} : vector<2x8x128xbf16> to vector<2x8x16xbf16>
    %145 = vector.extract_strided_slice %16 {offsets = [0, 0, 112], sizes = [2, 8, 16], strides = [1, 1, 1]} : vector<2x8x128xbf16> to vector<2x8x16xbf16>
    "tpu.trace_start"() <{level = 10 : i32, message = "bqd,bkd->bqk"}> : () -> ()
    %cst_50 = arith.constant dense<0.000000e+00> : vector<2x8x8xf32>
    %146 = tpu.matmul %143, %144, %cst_50 {dimension_numbers = #tpu.dot_dimension_numbers<[2], [2], [1], [1], [0, 0, 0, 1, 1, 1], [0], [0]>} : vector<2x8x16xbf16>, vector<2x8x16xbf16>, vector<2x8x8xf32> -> vector<2x8x8xf32>
    "tpu.trace_stop"() : () -> ()
    %cst_51 = arith.constant dense<0xFF800000> : vector<2x8xf32>
    %147 = vector.multi_reduction <maximumf>, %146, %cst_51 [2] : vector<2x8x8xf32> to vector<2x8xf32>
    %148 = vector.shape_cast %147 : vector<2x8xf32> to vector<2x8x1xf32>
    %149 = vector.broadcast %148 : vector<2x8x1xf32> to vector<2x8x8xf32>
    %150 = arith.subf %146, %149 : vector<2x8x8xf32>
    %151 = math.exp %150 : vector<2x8x8xf32>
    %cst_52 = arith.constant dense<0.000000e+00> : vector<2x8xf32>
    %152 = vector.multi_reduction <add>, %151, %cst_52 [2] : vector<2x8x8xf32> to vector<2x8xf32>
    %153 = vector.shape_cast %152 : vector<2x8xf32> to vector<2x8x1xf32>
    %154 = tpu.reciprocal %153 {approx = true} : vector<2x8x1xf32> -> vector<2x8x1xf32>
    %155 = vector.broadcast %154 : vector<2x8x1xf32> to vector<2x8x8xf32>
    %156 = arith.mulf %151, %155 : vector<2x8x8xf32>
    %157 = arith.truncf %156 : vector<2x8x8xf32> to vector<2x8x8xbf16>
    "tpu.trace_start"() <{level = 10 : i32, message = "bqk,bkd->bqd"}> : () -> ()
    %cst_53 = arith.constant dense<0.000000e+00> : vector<2x8x16xf32>
    %158 = tpu.matmul %157, %145, %cst_53 {dimension_numbers = #tpu.dot_dimension_numbers<[2], [1], [1], [2], [0, 0, 0, 1, 1, 2], [0], [0]>} : vector<2x8x8xbf16>, vector<2x8x16xbf16>, vector<2x8x16xf32> -> vector<2x8x16xf32>
    "tpu.trace_stop"() : () -> ()
    %159 = arith.truncf %158 : vector<2x8x16xf32> to vector<2x8x16xbf16>
    %c0_54 = arith.constant 0 : index
    %c0_55 = arith.constant 0 : index
    %c112 = arith.constant 112 : index
    %160 = vector.load %arg13[%c0_54, %c0_55, %c112] : memref<2x8x128xbf16, #tpu.memory_space<vmem>>, vector<2x8x16xbf16>
    tpu.vector_store %arg13[%c0_54, %c0_55, %c112], %159 {strides = array<i32>} : memref<2x8x128xbf16, #tpu.memory_space<vmem>>, vector<2x8x16xbf16>,
    %c0_56 = arith.constant 0 : index
    %c0_57 = arith.constant 0 : index
    %c0_58 = arith.constant 0 : index
    %161 = vector.load %arg13[%c0_56, %c0_57, %c0_58] : memref<2x8x128xbf16, #tpu.memory_space<vmem>>, vector<2x8x128xbf16>
    %162 = vector.shape_cast %161 : vector<2x8x128xbf16> to vector<16x128xbf16>
    %c0_59 = arith.constant 0 : index
    %c0_60 = arith.constant 0 : index
    %163 = vector.load %arg4[%c0_59, %c0_60] : memref<128x128xbf16, #tpu.memory_space<vmem>>, vector<128x128xbf16>
    %cst_61 = arith.constant dense<0.000000e+00> : vector<16x128xf32>
    %164 = tpu.matmul %162, %163, %cst_61 {dimension_numbers = #tpu.dot_dimension_numbers<[1], [0], [0], [1], [0, 0, 1, 1], [], []>} : vector<16x128xbf16>, vector<128x128xbf16>, vector<16x128xf32> -> vector<16x128xf32>
    %c0_62 = arith.constant 0 : index
    %c0_63 = arith.constant 0 : index
    %165 = vector.load %arg5[%c0_62, %c0_63] : memref<1x128xf32, #tpu.memory_space<vmem>>, vector<1x128xf32>
    %166 = vector.broadcast %165 : vector<1x128xf32> to vector<16x128xf32>
    %167 = arith.addf %164, %166 : vector<16x128xf32>
    %168 = arith.addf %1, %167 : vector<16x128xf32>
    %c0_64 = arith.constant 0 : index
    %c0_65 = arith.constant 0 : index
    %169 = vector.load %arg6[%c0_64, %c0_65] : memref<1x128xf32, #tpu.memory_space<vmem>>, vector<1x128xf32>
    %c0_66 = arith.constant 0 : index
    %c0_67 = arith.constant 0 : index
    %170 = vector.load %arg7[%c0_66, %c0_67] : memref<1x128xf32, #tpu.memory_space<vmem>>, vector<1x128xf32>
    %cst_68 = arith.constant dense<0.000000e+00> : vector<16xf32>
    %171 = vector.multi_reduction <add>, %168, %cst_68 [1] : vector<16x128xf32> to vector<16xf32>
    %172 = vector.shape_cast %171 : vector<16xf32> to vector<16x1xf32>
    %cst_69 = arith.constant 1.280000e+02 : f32
    %173 = vector.broadcast %cst_69 : f32 to vector<16x1xf32>
    %174 = arith.divf %172, %173 : vector<16x1xf32>
    %175 = vector.broadcast %174 : vector<16x1xf32> to vector<16x128xf32>
    %176 = arith.subf %168, %175 : vector<16x128xf32>
    %177 = arith.mulf %176, %176 : vector<16x128xf32>
    %cst_70 = arith.constant dense<0.000000e+00> : vector<16xf32>
    %178 = vector.multi_reduction <add>, %177, %cst_70 [1] : vector<16x128xf32> to vector<16xf32>
    %179 = vector.shape_cast %178 : vector<16xf32> to vector<16x1xf32>
    %cst_71 = arith.constant 1.280000e+02 : f32
    %180 = vector.broadcast %cst_71 : f32 to vector<16x1xf32>
    %181 = arith.divf %179, %180 : vector<16x1xf32>
    %182 = vector.broadcast %174 : vector<16x1xf32> to vector<16x128xf32>
    %183 = arith.subf %168, %182 : vector<16x128xf32>
    %cst_72 = arith.constant 9.99999974E-6 : f32
    %184 = vector.broadcast %cst_72 : f32 to vector<16x1xf32>
    %185 = arith.addf %181, %184 : vector<16x1xf32>
    %186 = math.rsqrt %185 : vector<16x1xf32>
    %187 = vector.broadcast %186 : vector<16x1xf32> to vector<16x128xf32>
    %188 = arith.mulf %183, %187 : vector<16x128xf32>
    %189 = vector.broadcast %169 : vector<1x128xf32> to vector<16x128xf32>
    %190 = arith.mulf %188, %189 : vector<16x128xf32>
    %191 = vector.broadcast %170 : vector<1x128xf32> to vector<16x128xf32>
    %192 = arith.addf %190, %191 : vector<16x128xf32>
    %193 = arith.truncf %192 : vector<16x128xf32> to vector<16x128xbf16>
    %c0_73 = arith.constant 0 : index
    %c0_74 = arith.constant 0 : index
    %194 = vector.load %arg8[%c0_73, %c0_74] : memref<128x128xbf16, #tpu.memory_space<vmem>>, vector<128x128xbf16>
    %cst_75 = arith.constant dense<0.000000e+00> : vector<16x128xf32>
    %195 = tpu.matmul %193, %194, %cst_75 {dimension_numbers = #tpu.dot_dimension_numbers<[1], [0], [0], [1], [0, 0, 1, 1], [], []>} : vector<16x128xbf16>, vector<128x128xbf16>, vector<16x128xf32> -> vector<16x128xf32>
    %c0_76 = arith.constant 0 : index
    %c0_77 = arith.constant 0 : index
    %196 = vector.load %arg9[%c0_76, %c0_77] : memref<1x128xf32, #tpu.memory_space<vmem>>, vector<1x128xf32>
    %197 = vector.broadcast %196 : vector<1x128xf32> to vector<16x128xf32>
    %198 = arith.addf %195, %197 : vector<16x128xf32>
    %199 = arith.addf %192, %198 : vector<16x128xf32>
    %c0_78 = arith.constant 0 : index
    %c0_79 = arith.constant 0 : index
    %200 = vector.load %arg10[%c0_78, %c0_79] : memref<1x128xf32, #tpu.memory_space<vmem>>, vector<1x128xf32>
    %c0_80 = arith.constant 0 : index
    %c0_81 = arith.constant 0 : index
    %201 = vector.load %arg11[%c0_80, %c0_81] : memref<1x128xf32, #tpu.memory_space<vmem>>, vector<1x128xf32>
    %cst_82 = arith.constant dense<0.000000e+00> : vector<16xf32>
    %202 = vector.multi_reduction <add>, %199, %cst_82 [1] : vector<16x128xf32> to vector<16xf32>
    %203 = vector.shape_cast %202 : vector<16xf32> to vector<16x1xf32>
    %cst_83 = arith.constant 1.280000e+02 : f32
    %204 = vector.broadcast %cst_83 : f32 to vector<16x1xf32>
    %205 = arith.divf %203, %204 : vector<16x1xf32>
    %206 = vector.broadcast %205 : vector<16x1xf32> to vector<16x128xf32>
    %207 = arith.subf %199, %206 : vector<16x128xf32>
    %208 = arith.mulf %207, %207 : vector<16x128xf32>
    %cst_84 = arith.constant dense<0.000000e+00> : vector<16xf32>
    %209 = vector.multi_reduction <add>, %208, %cst_84 [1] : vector<16x128xf32> to vector<16xf32>
    %210 = vector.shape_cast %209 : vector<16xf32> to vector<16x1xf32>
    %cst_85 = arith.constant 1.280000e+02 : f32
    %211 = vector.broadcast %cst_85 : f32 to vector<16x1xf32>
    %212 = arith.divf %210, %211 : vector<16x1xf32>
    %213 = vector.broadcast %205 : vector<16x1xf32> to vector<16x128xf32>
    %214 = arith.subf %199, %213 : vector<16x128xf32>
    %cst_86 = arith.constant 9.99999974E-6 : f32
    %215 = vector.broadcast %cst_86 : f32 to vector<16x1xf32>
    %216 = arith.addf %212, %215 : vector<16x1xf32>
    %217 = math.rsqrt %216 : vector<16x1xf32>
    %218 = vector.broadcast %217 : vector<16x1xf32> to vector<16x128xf32>
    %219 = arith.mulf %214, %218 : vector<16x128xf32>
    %220 = vector.broadcast %200 : vector<1x128xf32> to vector<16x128xf32>
    %221 = arith.mulf %219, %220 : vector<16x128xf32>
    %222 = vector.broadcast %201 : vector<1x128xf32> to vector<16x128xf32>
    %223 = arith.addf %221, %222 : vector<16x128xf32>
    %224 = vector.shape_cast %223 : vector<16x128xf32> to vector<2x8x128xf32>
    %c0_87 = arith.constant 0 : index
    %c0_88 = arith.constant 0 : index
    %c0_89 = arith.constant 0 : index
    %225 = vector.load %arg12[%c0_87, %c0_88, %c0_89] : memref<2x8x128xf32, #tpu.memory_space<vmem>>, vector<2x8x128xf32>
    tpu.vector_store %arg12[%c0_87, %c0_88, %c0_89], %224 {strides = array<i32>} : memref<2x8x128xf32, #tpu.memory_space<vmem>>, vector<2x8x128xf32>,
    return
  }
  func.func @transform_0(%arg0: i32) -> (i32, i32, i32) {
    %c0_i32 = arith.constant 0 : i32
    %c0_i32_0 = arith.constant 0 : i32
    %c0_i32_1 = arith.constant 0 : i32
    return %arg0, %c0_i32, %c0_i32_0 : i32, i32, i32
  }
  func.func @transform_1(%arg0: i32) -> (i32, i32) {
    %c0_i32 = arith.constant 0 : i32
    %c0_i32_0 = arith.constant 0 : i32
    %c0_i32_1 = arith.constant 0 : i32
    return %c0_i32, %c0_i32_0 : i32, i32
  }
  func.func @transform_2(%arg0: i32) -> (i32, i32) {
    %c0_i32 = arith.constant 0 : i32
    %c0_i32_0 = arith.constant 0 : i32
    %c0_i32_1 = arith.constant 0 : i32
    return %c0_i32, %c0_i32_0 : i32, i32
  }
  func.func @transform_3(%arg0: i32) -> (i32, i32) {
    %c0_i32 = arith.constant 0 : i32
    %c0_i32_0 = arith.constant 0 : i32
    %c0_i32_1 = arith.constant 0 : i32
    return %c0_i32, %c0_i32_0 : i32, i32
  }
  func.func @transform_4(%arg0: i32) -> (i32, i32) {
    %c0_i32 = arith.constant 0 : i32
    %c0_i32_0 = arith.constant 0 : i32
    %c0_i32_1 = arith.constant 0 : i32
    return %c0_i32, %c0_i32_0 : i32, i32
  }
  func.func @transform_5(%arg0: i32) -> (i32, i32) {
    %c0_i32 = arith.constant 0 : i32
    %c0_i32_0 = arith.constant 0 : i32
    %c0_i32_1 = arith.constant 0 : i32
    return %c0_i32, %c0_i32_0 : i32, i32
  }
  func.func @transform_6(%arg0: i32) -> (i32, i32) {
    %c0_i32 = arith.constant 0 : i32
    %c0_i32_0 = arith.constant 0 : i32
    %c0_i32_1 = arith.constant 0 : i32
    return %c0_i32, %c0_i32_0 : i32, i32
  }
  func.func @transform_7(%arg0: i32) -> (i32, i32) {
    %c0_i32 = arith.constant 0 : i32
    %c0_i32_0 = arith.constant 0 : i32
    %c0_i32_1 = arith.constant 0 : i32
    return %c0_i32, %c0_i32_0 : i32, i32
  }
  func.func @transform_8(%arg0: i32) -> (i32, i32) {
    %c0_i32 = arith.constant 0 : i32
    %c0_i32_0 = arith.constant 0 : i32
    %c0_i32_1 = arith.constant 0 : i32
    return %c0_i32, %c0_i32_0 : i32, i32
  }
  func.func @transform_9(%arg0: i32) -> (i32, i32) {
    %c0_i32 = arith.constant 0 : i32
    %c0_i32_0 = arith.constant 0 : i32
    %c0_i32_1 = arith.constant 0 : i32
    return %c0_i32, %c0_i32_0 : i32, i32
  }
  func.func @transform_10(%arg0: i32) -> (i32, i32) {
    %c0_i32 = arith.constant 0 : i32
    %c0_i32_0 = arith.constant 0 : i32
    %c0_i32_1 = arith.constant 0 : i32
    return %c0_i32, %c0_i32_0 : i32, i32
  }
  func.func @transform_11(%arg0: i32) -> (i32, i32, i32) {
    %c0_i32 = arith.constant 0 : i32
    %c0_i32_0 = arith.constant 0 : i32
    %c0_i32_1 = arith.constant 0 : i32
    return %arg0, %c0_i32, %c0_i32_0 : i32, i32, i32
  }
}

</mosaic_0001>

<llo_original>
// kernel: simple_decoder_layer.1
$region0: #{simple_decoder_layer.1}
  #allocation0 [shape = 'u32[]', space=smem, size = 0x4, offset = 0x4, fixed_abs, tag = 'smem constant byte address 0x4 - core index']
  #allocation1 [shape = 'u32[72,128]{1,0:T(1,128)}', space=vmem, size = 0x9000, scoped, tag = 'internal scratch']
  #allocation2 [shape = 'bf16[2,8,128]{2,1,0:T(8,128)(2,1)}', space=vmem, size = 0x1000, scoped, tag = 'scratch operand']
  %s0 = inlined_call_operand.vmem [shape: f32[2,8,128], index: 0, kind: input, shape index: {}]
  %s1 = inlined_call_operand.vmem [shape: bf16[128,384], index: 1, kind: input, shape index: {}]
  %s2 = inlined_call_operand.vmem [shape: f32[1,384], index: 2, kind: input, shape index: {}]
  %s3 = inlined_call_operand.vmem [shape: bf16[128,128], index: 3, kind: input, shape index: {}]
  %s4 = inlined_call_operand.vmem [shape: f32[1,128], index: 4, kind: input, shape index: {}]
  %s5 = inlined_call_operand.vmem [shape: f32[1,128], index: 5, kind: input, shape index: {}]
  %s6 = inlined_call_operand.vmem [shape: f32[1,128], index: 6, kind: input, shape index: {}]
  %s7 = inlined_call_operand.vmem [shape: bf16[128,128], index: 7, kind: input, shape index: {}]
  %s8 = inlined_call_operand.vmem [shape: f32[1,128], index: 8, kind: input, shape index: {}]
  %s9 = inlined_call_operand.vmem [shape: f32[1,128], index: 9, kind: input, shape index: {}]
  %s10 = inlined_call_operand.vmem [shape: f32[1,128], index: 10, kind: input, shape index: {}]
  %s11 = inlined_call_operand.hbm [shape: f32[2,8,128], index: 11, kind: output, shape index: {}]
  %s12 = sld [smem:[#allocation0]]
  $region54: #{simple_decoder_layer.1} parent=0
    _
  %s14 = ssub.s32 1, %s12
  %s15 = scalar_select 0, %s14, %s12
  $region1: #{simple_decoder_layer.1} parent=0
    #allocation3 [shape = 'u8[8192]{0}', space=vmem, size = 0x2000, scoped, tag = 'output window, operand 0, single buffered']
    #allocation4 [shape = 's32[1]{0}', space=sflag, size = 0x4, scoped, tag = 'scoped memory for simple_decoder_layer.1']
    %16 = vsyncpa [#allocation4], 0
    // Predicated region
    $region2: #{simple_decoder_layer.1} parent=1 // pred_check
      _
    $region3: #{simple_decoder_layer.1} parent=1 // pred_check_branch
      %18 = sbr.rel (0) target = $region5
    $region4: #{simple_decoder_layer.1} parent=1 // pred_region
      _
    $region5: #{simple_decoder_layer.1} parent=1 // pred_fallthru
      _
    // Predicated region
    $region6: #{simple_decoder_layer.1} parent=1 // pred_check
      _
    $region7: #{simple_decoder_layer.1} parent=1 // pred_check_branch
      %20 = sbr.rel (0) target = $region9
    $region8: #{simple_decoder_layer.1} parent=1 // pred_region
      _
    $region9: #{simple_decoder_layer.1} parent=1 // pred_fallthru
      _
    // Predicated region
    $region10: #{simple_decoder_layer.1} parent=1 // pred_check
      _
    $region11: #{simple_decoder_layer.1} parent=1 // pred_check_branch
      %22 = sbr.rel (0) target = $region13
    $region12: #{simple_decoder_layer.1} parent=1 // pred_region
      _
    $region13: #{simple_decoder_layer.1} parent=1 // pred_fallthru
      _
    // Predicated region
    $region14: #{simple_decoder_layer.1} parent=1 // pred_check
      _
    $region15: #{simple_decoder_layer.1} parent=1 // pred_check_branch
      %24 = sbr.rel (0) target = $region17
    $region16: #{simple_decoder_layer.1} parent=1 // pred_region
      _
    $region17: #{simple_decoder_layer.1} parent=1 // pred_fallthru
      _
    // Predicated region
    $region18: #{simple_decoder_layer.1} parent=1 // pred_check
      _
    $region19: #{simple_decoder_layer.1} parent=1 // pred_check_branch
      %26 = sbr.rel (0) target = $region21
    $region20: #{simple_decoder_layer.1} parent=1 // pred_region
      _
    $region21: #{simple_decoder_layer.1} parent=1 // pred_fallthru
      _
    // Predicated region
    $region22: #{simple_decoder_layer.1} parent=1 // pred_check
      _
    $region23: #{simple_decoder_layer.1} parent=1 // pred_check_branch
      %28 = sbr.rel (0) target = $region25
    $region24: #{simple_decoder_layer.1} parent=1 // pred_region
      _
    $region25: #{simple_decoder_layer.1} parent=1 // pred_fallthru
      _
    // Predicated region
    $region26: #{simple_decoder_layer.1} parent=1 // pred_check
      _
    $region27: #{simple_decoder_layer.1} parent=1 // pred_check_branch
      %30 = sbr.rel (0) target = $region29
    $region28: #{simple_decoder_layer.1} parent=1 // pred_region
      _
    $region29: #{simple_decoder_layer.1} parent=1 // pred_fallthru
      _
    // Predicated region
    $region30: #{simple_decoder_layer.1} parent=1 // pred_check
      _
    $region31: #{simple_decoder_layer.1} parent=1 // pred_check_branch
      %32 = sbr.rel (0) target = $region33
    $region32: #{simple_decoder_layer.1} parent=1 // pred_region
      _
    $region33: #{simple_decoder_layer.1} parent=1 // pred_fallthru
      _
    // Predicated region
    $region34: #{simple_decoder_layer.1} parent=1 // pred_check
      _
    $region35: #{simple_decoder_layer.1} parent=1 // pred_check_branch
      %34 = sbr.rel (0) target = $region37
    $region36: #{simple_decoder_layer.1} parent=1 // pred_region
      _
    $region37: #{simple_decoder_layer.1} parent=1 // pred_fallthru
      _
    // Predicated region
    $region38: #{simple_decoder_layer.1} parent=1 // pred_check
      _
    $region39: #{simple_decoder_layer.1} parent=1 // pred_check_branch
      %36 = sbr.rel (0) target = $region41
    $region40: #{simple_decoder_layer.1} parent=1 // pred_region
      _
    $region41: #{simple_decoder_layer.1} parent=1 // pred_fallthru
      _
    // Predicated region
    $region42: #{simple_decoder_layer.1} parent=1 // pred_check
      _
    $region43: #{simple_decoder_layer.1} parent=1 // pred_check_branch
      %38 = sbr.rel (0) target = $region45
    $region44: #{simple_decoder_layer.1} parent=1 // pred_region
      _
    $region45: #{simple_decoder_layer.1} parent=1 // pred_fallthru
      _
    %v40 = vld [vmem:[%s0] sm:$0xff]
    %v41 = vld [vmem:[%s0 + $0x8] sm:$0xff]
    %v42 = vpack.c.bf16 %v41, %v40
    %v43 = vld [vmem:[%s1] sm:$0xff]
    %v44 = vld [vmem:[%s1 + $0x8] sm:$0xf]
    %v45 = vld [vmem:[%s1 + $0xc] sm:$0xff]
    %v46 = vld [vmem:[%s1 + $0x14] sm:$0xf]
    %v47 = vld [vmem:[%s1 + $0x18] sm:$0xff]
    %v48 = vld [vmem:[%s1 + $0x20] sm:$0xf]
    %v49 = vld [vmem:[%s1 + $0x24] sm:$0xff]
    %v50 = vld [vmem:[%s1 + $0x2c] sm:$0xf]
    %v51 = vld [vmem:[%s1 + $0x30] sm:$0xff]
    %v52 = vld [vmem:[%s1 + $0x38] sm:$0xf]
    %v53 = vld [vmem:[%s1 + $0x3c] sm:$0xff]
    %v54 = vld [vmem:[%s1 + $0x44] sm:$0xf]
    %v55 = vld [vmem:[%s1 + $0x48] sm:$0xff]
    %v56 = vld [vmem:[%s1 + $0x50] sm:$0xf]
    %v57 = vld [vmem:[%s1 + $0x54] sm:$0xff]
    %v58 = vld [vmem:[%s1 + $0x5c] sm:$0xf]
    %v59 = vld [vmem:[%s1 + $0x60] sm:$0xff]
    %v60 = vld [vmem:[%s1 + $0x68] sm:$0xf]
    %v61 = vld [vmem:[%s1 + $0x6c] sm:$0xff]
    %v62 = vld [vmem:[%s1 + $0x74] sm:$0xf]
    %v63 = vld [vmem:[%s1 + $0x78] sm:$0xff]
    %v64 = vld [vmem:[%s1 + $0x80] sm:$0xf]
    %v65 = vld [vmem:[%s1 + $0x84] sm:$0xff]
    %v66 = vld [vmem:[%s1 + $0x8c] sm:$0xf]
    %v67 = vld [vmem:[%s1 + $0x90] sm:$0xff]
    %v68 = vld [vmem:[%s1 + $0x98] sm:$0xf]
    %v69 = vld [vmem:[%s1 + $0x9c] sm:$0xff]
    %v70 = vld [vmem:[%s1 + $0xa4] sm:$0xf]
    %v71 = vld [vmem:[%s1 + $0xa8] sm:$0xff]
    %v72 = vld [vmem:[%s1 + $0xb0] sm:$0xf]
    %v73 = vld [vmem:[%s1 + $0xb4] sm:$0xff]
    %v74 = vld [vmem:[%s1 + $0xbc] sm:$0xf]
    %v75 = vld [vmem:[%s2] sm:$0x7]
    %v77 = vperm.slane %v75, 0
    %v78 = vperm.slane %v75, 1
    %v79 = vperm.slane %v75, 2
    %v115 = vunpack.c.l.b16 %v43
    %v116 = vunpack.c.h.b16 %v43
    %v117 = vunpack.c.l.b16 %v44
    %v118 = vunpack.c.l.b16 %v45
    %v119 = vunpack.c.h.b16 %v45
    %v120 = vunpack.c.l.b16 %v46
    %v121 = vunpack.c.l.b16 %v47
    %v122 = vunpack.c.h.b16 %v47
    %v123 = vunpack.c.l.b16 %v48
    %v124 = vunpack.c.l.b16 %v49
    %v125 = vunpack.c.h.b16 %v49
    %v126 = vunpack.c.l.b16 %v50
    %v127 = vunpack.c.l.b16 %v51
    %v128 = vunpack.c.h.b16 %v51
    %v129 = vunpack.c.l.b16 %v52
    %v130 = vunpack.c.l.b16 %v53
    %v131 = vunpack.c.h.b16 %v53
    %v132 = vunpack.c.l.b16 %v54
    %v133 = vunpack.c.l.b16 %v55
    %v134 = vunpack.c.h.b16 %v55
    %v135 = vunpack.c.l.b16 %v56
    %v136 = vunpack.c.l.b16 %v57
    %v137 = vunpack.c.h.b16 %v57
    %v138 = vunpack.c.l.b16 %v58
    %v139 = vunpack.c.l.b16 %v59
    %v140 = vunpack.c.h.b16 %v59
    %v141 = vunpack.c.l.b16 %v60
    %v142 = vunpack.c.l.b16 %v61
    %v143 = vunpack.c.h.b16 %v61
    %v144 = vunpack.c.l.b16 %v62
    %v145 = vunpack.c.l.b16 %v63
    %v146 = vunpack.c.h.b16 %v63
    %v147 = vunpack.c.l.b16 %v64
    %v148 = vunpack.c.l.b16 %v65
    %v149 = vunpack.c.h.b16 %v65
    %v150 = vunpack.c.l.b16 %v66
    %v151 = vunpack.c.l.b16 %v67
    %v152 = vunpack.c.h.b16 %v67
    %v153 = vunpack.c.l.b16 %v68
    %v154 = vunpack.c.l.b16 %v69
    %v155 = vunpack.c.h.b16 %v69
    %v156 = vunpack.c.l.b16 %v70
    %v157 = vunpack.c.l.b16 %v71
    %v158 = vunpack.c.h.b16 %v71
    %v159 = vunpack.c.l.b16 %v72
    %v160 = vunpack.c.l.b16 %v73
    %v161 = vunpack.c.h.b16 %v73
    %v162 = vunpack.c.l.b16 %v74
    %v163 = vpack.c.b16 %v118, %v115
    %v164 = vpack.c.b16 %v119, %v116
    %v165 = vpack.c.b16 %v120, %v117
    %v166 = vpack.c.b16 %v124, %v121
    %v167 = vpack.c.b16 %v125, %v122
    %v168 = vpack.c.b16 %v126, %v123
    %v169 = vpack.c.b16 %v130, %v127
    %v170 = vpack.c.b16 %v131, %v128
    %v171 = vpack.c.b16 %v132, %v129
    %v172 = vpack.c.b16 %v136, %v133
    %v173 = vpack.c.b16 %v137, %v134
    %v174 = vpack.c.b16 %v138, %v135
    %v175 = vpack.c.b16 %v142, %v139
    %v176 = vpack.c.b16 %v143, %v140
    %v177 = vpack.c.b16 %v144, %v141
    %v178 = vpack.c.b16 %v148, %v145
    %v179 = vpack.c.b16 %v149, %v146
    %v180 = vpack.c.b16 %v150, %v147
    %v181 = vpack.c.b16 %v154, %v151
    %v182 = vpack.c.b16 %v155, %v152
    %v183 = vpack.c.b16 %v156, %v153
    %v184 = vpack.c.b16 %v160, %v157
    %v185 = vpack.c.b16 %v161, %v158
    %v186 = vpack.c.b16 %v162, %v159
    %211 = vmatpush.bf16.msra.mxu0 %v184
    %212 = vmatpush.bf16.msra.mxu0 %v181
    %213 = vmatpush.bf16.msra.mxu0 %v178
    %214 = vmatpush.bf16.msra.mxu0 %v175
    %215 = vmatpush.bf16.msra.mxu0 %v172
    %216 = vmatpush.bf16.msra.mxu0 %v169
    %217 = vmatpush.bf16.msra.mxu0 %v166
    %218 = vmatpush.bf16.msra.mxu0 %v163
    %219 = vmatmul.bf16.gmra.mxu0 %v42
    %v220 = vpop.f32.mrf.mxu0
    %v221 = vadd.f32 %v77, %v220
    %v222 = vpop.f32.mrf.mxu0
    %v223 = vadd.f32 %v77, %v222
    %224 = vdwg.mxu0
    %225 = vmatpush.bf16.msra.mxu0 %v185
    %226 = vmatpush.bf16.msra.mxu0 %v182
    %227 = vmatpush.bf16.msra.mxu0 %v179
    %228 = vmatpush.bf16.msra.mxu0 %v176
    %229 = vmatpush.bf16.msra.mxu0 %v173
    %230 = vmatpush.bf16.msra.mxu0 %v170
    %231 = vmatpush.bf16.msra.mxu0 %v167
    %232 = vmatpush.bf16.msra.mxu0 %v164
    %233 = vmatmul.bf16.gmra.mxu0 %v42
    %v234 = vpop.f32.mrf.mxu0
    %v235 = vadd.f32 %v78, %v234
    %v236 = vpop.f32.mrf.mxu0
    %v237 = vadd.f32 %v78, %v236
    %238 = vdwg.mxu0
    %239 = vmatpush.bf16.msra.mxu0 %v186
    %240 = vmatpush.bf16.msra.mxu0 %v183
    %241 = vmatpush.bf16.msra.mxu0 %v180
    %242 = vmatpush.bf16.msra.mxu0 %v177
    %243 = vmatpush.bf16.msra.mxu0 %v174
    %244 = vmatpush.bf16.msra.mxu0 %v171
    %245 = vmatpush.bf16.msra.mxu0 %v168
    %246 = vmatpush.bf16.msra.mxu0 %v165
    %247 = vmatmul.bf16.gmra.mxu0 %v42
    %v248 = vpop.f32.mrf.mxu0
    %v249 = vadd.f32 %v79, %v248
    %v250 = vpop.f32.mrf.mxu0
    %v251 = vadd.f32 %v79, %v250
    %252 = vdwg.mxu0
    %v253 = vmul.f32 %v221, 0.25
    %v254 = vmul.f32 %v223, 0.25
    %v255 = vpack.c.bf16 %v253, %v253
    %v256 = vpack.c.bf16 %v254, %v254
    %v257 = vpack.c.bf16 %v235, %v235
    %v258 = vpack.c.bf16 %v237, %v237
    %v259 = vpack.c.bf16 %v249, %v249
    %v260 = vpack.c.bf16 %v251, %v251
    %vm261 = vcmask 130048
    %v263 = vsel %vm261, %v255, 0
    %v266 = vsel %vm261, %v257, 0
    %268 = vmatpush.bf16.xpose.msra.mxu0 0
    %269 = vmatpush.bf16.xpose.msra.mxu0 0
    %270 = vmatpush.bf16.xpose.msra.mxu0 0
    %271 = vmatpush.bf16.xpose.msra.mxu0 0
    %272 = vmatpush.bf16.xpose.msra.mxu0 0
    %273 = vmatpush.bf16.xpose.msra.mxu0 0
    %274 = vmatpush.bf16.xpose.msra.mxu0 0
    %275 = vmatpush.bf16.xpose.msra.mxu0 %v266
    %276 = vmatmul.bf16.gmra.mxu0 %v263
    %v277 = vpop.f32.mrf.mxu0
    %v278 = vadd.f32 0.0, %v277
    %v279 = vpop.f32.mrf.mxu0
    %280 = vdwg.mxu0
    %v282 = vsel %vm261, %v256, 0
    %v285 = vsel %vm261, %v258, 0
    %287 = vmatpush.bf16.xpose.msra.mxu0 0
    %288 = vmatpush.bf16.xpose.msra.mxu0 0
    %289 = vmatpush.bf16.xpose.msra.mxu0 0
    %290 = vmatpush.bf16.xpose.msra.mxu0 0
    %291 = vmatpush.bf16.xpose.msra.mxu0 0
    %292 = vmatpush.bf16.xpose.msra.mxu0 0
    %293 = vmatpush.bf16.xpose.msra.mxu0 0
    %294 = vmatpush.bf16.xpose.msra.mxu0 %v285
    %295 = vmatmul.bf16.gmra.mxu0 %v282
    %v296 = vpop.f32.mrf.mxu0
    %v297 = vadd.f32 0.0, %v296
    %v298 = vpop.f32.mrf.mxu0
    %299 = vdwg.mxu0
    %vm300 = vcmask 64512
    %v301 = vsel %vm300, %v278, -inf
    %302 = vmax.xlane.f32.xlu0 %v301
    %v303 = vpop.xlane.xlu0 %302
    %v304 = vsel %vm300, %v297, -inf
    %305 = vmax.xlane.f32.xlu0 %v304
    %v306 = vpop.xlane.xlu0 %305
    %v307 = vsub.f32 %v278, %v303
    %v308 = vsub.f32 %v297, %v306
    %v309 = vmul.f32 %v307, 1.442695
    %v310 = vpow.pop %v309
    %v311 = vmul.f32 %v308, 1.442695
    %v312 = vpow.pop %v311
    %v313 = vsel %vm300, %v310, 0.0
    %314 = vadd.xlane.f32.xlu0 %v313
    %v315 = vpop.xlane.xlu0 %314
    %v316 = vsel %vm300, %v312, 0.0
    %317 = vadd.xlane.f32.xlu0 %v316
    %v318 = vpop.xlane.xlu0 %317
    %v319 = vrcp.pop %v315
    %v320 = vrcp.pop %v318
    %v321 = vmul.f32 %v310, %v319
    %v322 = vmul.f32 %v312, %v320
    %v323 = vpack.c.bf16 %v321, %v321
    %v324 = vpack.c.bf16 %v322, %v322
    %v326 = vsel %vm300, %v323, 0
    %vm328 = vcmask 1043456
    %v330 = vsel %vm328, %v259, 0
    %332 = vmatpush.bf16.msra.mxu0 0
    %333 = vmatpush.bf16.msra.mxu0 0
    %334 = vmatpush.bf16.msra.mxu0 0
    %335 = vmatpush.bf16.msra.mxu0 0
    %336 = vmatpush.bf16.msra.mxu0 0
    %337 = vmatpush.bf16.msra.mxu0 0
    %338 = vmatpush.bf16.msra.mxu0 0
    %339 = vmatpush.bf16.msra.mxu0 %v330
    %340 = vmatmul.bf16.gmra.mxu0 %v326
    %v341 = vpop.f32.mrf.mxu0
    %v342 = vadd.f32 0.0, %v341
    %v343 = vpop.f32.mrf.mxu0
    %344 = vdwg.mxu0
    %v346 = vsel %vm300, %v324, 0
    %v349 = vsel %vm328, %v260, 0
    %351 = vmatpush.bf16.msra.mxu0 0
    %352 = vmatpush.bf16.msra.mxu0 0
    %353 = vmatpush.bf16.msra.mxu0 0
    %354 = vmatpush.bf16.msra.mxu0 0
    %355 = vmatpush.bf16.msra.mxu0 0
    %356 = vmatpush.bf16.msra.mxu0 0
    %357 = vmatpush.bf16.msra.mxu0 0
    %358 = vmatpush.bf16.msra.mxu0 %v349
    %359 = vmatmul.bf16.gmra.mxu0 %v346
    %v360 = vpop.f32.mrf.mxu0
    %v361 = vadd.f32 0.0, %v360
    %v362 = vpop.f32.mrf.mxu0
    %363 = vdwg.mxu0
    %v364 = vpack.c.bf16 %v342, %v342
    %v365 = vpack.c.bf16 %v361, %v361
    %vm366 = vcmask 125952
    %367 = vst.msk [vmem:[#allocation2] sm:$0xf] %vm366, %v364
    %368 = vst.msk [vmem:[#allocation2 + $0x4] sm:$0xf] %vm366, %v365
    %v370 = vunpack.c.l.b16 %v255
    %v371 = vpack.c.b16 %v370, %v370
    %372 = vrot.lane.b32.xlu0 %v371, 112
    %v373 = vpop.permute.xlu0 %372
    %v375 = vunpack.c.l.b16 %v257
    %v376 = vpack.c.b16 %v375, %v375
    %377 = vrot.lane.b32.xlu0 %v376, 112
    %v378 = vpop.permute.xlu0 %377
    %v380 = vsel %vm261, %v373, 0
    %v383 = vsel %vm261, %v378, 0
    %385 = vmatpush.bf16.xpose.msra.mxu0 0
    %386 = vmatpush.bf16.xpose.msra.mxu0 0
    %387 = vmatpush.bf16.xpose.msra.mxu0 0
    %388 = vmatpush.bf16.xpose.msra.mxu0 0
    %389 = vmatpush.bf16.xpose.msra.mxu0 0
    %390 = vmatpush.bf16.xpose.msra.mxu0 0
    %391 = vmatpush.bf16.xpose.msra.mxu0 0
    %392 = vmatpush.bf16.xpose.msra.mxu0 %v383
    %393 = vmatmul.bf16.gmra.mxu0 %v380
    %v394 = vpop.f32.mrf.mxu0
    %v395 = vadd.f32 0.0, %v394
    %v396 = vpop.f32.mrf.mxu0
    %397 = vdwg.mxu0
    %v399 = vunpack.c.l.b16 %v256
    %v400 = vpack.c.b16 %v399, %v399
    %401 = vrot.lane.b32.xlu0 %v400, 112
    %v402 = vpop.permute.xlu0 %401
    %v404 = vunpack.c.l.b16 %v258
    %v405 = vpack.c.b16 %v404, %v404
    %406 = vrot.lane.b32.xlu0 %v405, 112
    %v407 = vpop.permute.xlu0 %406
    %v409 = vsel %vm261, %v402, 0
    %v412 = vsel %vm261, %v407, 0
    %414 = vmatpush.bf16.xpose.msra.mxu0 0
    %415 = vmatpush.bf16.xpose.msra.mxu0 0
    %416 = vmatpush.bf16.xpose.msra.mxu0 0
    %417 = vmatpush.bf16.xpose.msra.mxu0 0
    %418 = vmatpush.bf16.xpose.msra.mxu0 0
    %419 = vmatpush.bf16.xpose.msra.mxu0 0
    %420 = vmatpush.bf16.xpose.msra.mxu0 0
    %421 = vmatpush.bf16.xpose.msra.mxu0 %v412
    %422 = vmatmul.bf16.gmra.mxu0 %v409
    %v423 = vpop.f32.mrf.mxu0
    %v424 = vadd.f32 0.0, %v423
    %v425 = vpop.f32.mrf.mxu0
    %426 = vdwg.mxu0
    %v427 = vsel %vm300, %v395, -inf
    %428 = vmax.xlane.f32.xlu0 %v427
    %v429 = vpop.xlane.xlu0 %428
    %v430 = vsel %vm300, %v424, -inf
    %431 = vmax.xlane.f32.xlu0 %v430
    %v432 = vpop.xlane.xlu0 %431
    %v433 = vsub.f32 %v395, %v429
    %v434 = vsub.f32 %v424, %v432
    %v435 = vmul.f32 %v433, 1.442695
    %v436 = vpow.pop %v435
    %v437 = vmul.f32 %v434, 1.442695
    %v438 = vpow.pop %v437
    %v439 = vsel %vm300, %v436, 0.0
    %440 = vadd.xlane.f32.xlu0 %v439
    %v441 = vpop.xlane.xlu0 %440
    %v442 = vsel %vm300, %v438, 0.0
    %443 = vadd.xlane.f32.xlu0 %v442
    %v444 = vpop.xlane.xlu0 %443
    %v445 = vrcp.pop %v441
    %v446 = vrcp.pop %v444
    %v447 = vmul.f32 %v436, %v445
    %v448 = vmul.f32 %v438, %v446
    %v449 = vpack.c.bf16 %v447, %v447
    %v450 = vpack.c.bf16 %v448, %v448
    %v452 = vunpack.c.l.b16 %v259
    %v453 = vpack.c.b16 %v452, %v452
    %454 = vrot.lane.b32.xlu0 %v453, 112
    %v455 = vpop.permute.xlu0 %454
    %v457 = vsel %vm300, %v449, 0
    %v460 = vsel %vm328, %v455, 0
    %462 = vmatpush.bf16.msra.mxu0 0
    %463 = vmatpush.bf16.msra.mxu0 0
    %464 = vmatpush.bf16.msra.mxu0 0
    %465 = vmatpush.bf16.msra.mxu0 0
    %466 = vmatpush.bf16.msra.mxu0 0
    %467 = vmatpush.bf16.msra.mxu0 0
    %468 = vmatpush.bf16.msra.mxu0 0
    %469 = vmatpush.bf16.msra.mxu0 %v460
    %470 = vmatmul.bf16.gmra.mxu0 %v457
    %v471 = vpop.f32.mrf.mxu0
    %v472 = vadd.f32 0.0, %v471
    %v473 = vpop.f32.mrf.mxu0
    %474 = vdwg.mxu0
    %v476 = vunpack.c.l.b16 %v260
    %v477 = vpack.c.b16 %v476, %v476
    %478 = vrot.lane.b32.xlu0 %v477, 112
    %v479 = vpop.permute.xlu0 %478
    %v481 = vsel %vm300, %v450, 0
    %v484 = vsel %vm328, %v479, 0
    %486 = vmatpush.bf16.msra.mxu0 0
    %487 = vmatpush.bf16.msra.mxu0 0
    %488 = vmatpush.bf16.msra.mxu0 0
    %489 = vmatpush.bf16.msra.mxu0 0
    %490 = vmatpush.bf16.msra.mxu0 0
    %491 = vmatpush.bf16.msra.mxu0 0
    %492 = vmatpush.bf16.msra.mxu0 0
    %493 = vmatpush.bf16.msra.mxu0 %v484
    %494 = vmatmul.bf16.gmra.mxu0 %v481
    %v495 = vpop.f32.mrf.mxu0
    %v496 = vadd.f32 0.0, %v495
    %v497 = vpop.f32.mrf.mxu0
    %498 = vdwg.mxu0
    %v499 = vpack.c.bf16 %v472, %v472
    %v500 = vpack.c.bf16 %v496, %v496
    %503 = vrot.lane.b32.xlu0 %v499, 16
    %v504 = vpop.permute.xlu0 %503
    %505 = vrot.lane.b32.xlu0 %v500, 16
    %v506 = vpop.permute.xlu0 %505
    %vm509 = vcmask 257152
    %510 = vst.msk [vmem:[#allocation2] sm:$0xf] %vm509, %v504
    %511 = vst.msk [vmem:[#allocation2 + $0x4] sm:$0xf] %vm509, %v506
    %512 = vrot.lane.b32.xlu0 %v371, 96
    %v513 = vpop.permute.xlu0 %512
    %514 = vrot.lane.b32.xlu0 %v376, 96
    %v515 = vpop.permute.xlu0 %514
    %v517 = vsel %vm261, %v513, 0
    %v520 = vsel %vm261, %v515, 0
    %522 = vmatpush.bf16.xpose.msra.mxu0 0
    %523 = vmatpush.bf16.xpose.msra.mxu0 0
    %524 = vmatpush.bf16.xpose.msra.mxu0 0
    %525 = vmatpush.bf16.xpose.msra.mxu0 0
    %526 = vmatpush.bf16.xpose.msra.mxu0 0
    %527 = vmatpush.bf16.xpose.msra.mxu0 0
    %528 = vmatpush.bf16.xpose.msra.mxu0 0
    %529 = vmatpush.bf16.xpose.msra.mxu0 %v520
    %530 = vmatmul.bf16.gmra.mxu0 %v517
    %v531 = vpop.f32.mrf.mxu0
    %v532 = vadd.f32 0.0, %v531
    %v533 = vpop.f32.mrf.mxu0
    %534 = vdwg.mxu0
    %535 = vrot.lane.b32.xlu0 %v400, 96
    %v536 = vpop.permute.xlu0 %535
    %537 = vrot.lane.b32.xlu0 %v405, 96
    %v538 = vpop.permute.xlu0 %537
    %v540 = vsel %vm261, %v536, 0
    %v543 = vsel %vm261, %v538, 0
    %545 = vmatpush.bf16.xpose.msra.mxu0 0
    %546 = vmatpush.bf16.xpose.msra.mxu0 0
    %547 = vmatpush.bf16.xpose.msra.mxu0 0
    %548 = vmatpush.bf16.xpose.msra.mxu0 0
    %549 = vmatpush.bf16.xpose.msra.mxu0 0
    %550 = vmatpush.bf16.xpose.msra.mxu0 0
    %551 = vmatpush.bf16.xpose.msra.mxu0 0
    %552 = vmatpush.bf16.xpose.msra.mxu0 %v543
    %553 = vmatmul.bf16.gmra.mxu0 %v540
    %v554 = vpop.f32.mrf.mxu0
    %v555 = vadd.f32 0.0, %v554
    %v556 = vpop.f32.mrf.mxu0
    %557 = vdwg.mxu0
    %v558 = vsel %vm300, %v532, -inf
    %559 = vmax.xlane.f32.xlu0 %v558
    %v560 = vpop.xlane.xlu0 %559
    %v561 = vsel %vm300, %v555, -inf
    %562 = vmax.xlane.f32.xlu0 %v561
    %v563 = vpop.xlane.xlu0 %562
    %v564 = vsub.f32 %v532, %v560
    %v565 = vsub.f32 %v555, %v563
    %v566 = vmul.f32 %v564, 1.442695
    %v567 = vpow.pop %v566
    %v568 = vmul.f32 %v565, 1.442695
    %v569 = vpow.pop %v568
    %v570 = vsel %vm300, %v567, 0.0
    %571 = vadd.xlane.f32.xlu0 %v570
    %v572 = vpop.xlane.xlu0 %571
    %v573 = vsel %vm300, %v569, 0.0
    %574 = vadd.xlane.f32.xlu0 %v573
    %v575 = vpop.xlane.xlu0 %574
    %v576 = vrcp.pop %v572
    %v577 = vrcp.pop %v575
    %v578 = vmul.f32 %v567, %v576
    %v579 = vmul.f32 %v569, %v577
    %v580 = vpack.c.bf16 %v578, %v578
    %v581 = vpack.c.bf16 %v579, %v579
    %582 = vrot.lane.b32.xlu0 %v453, 96
    %v583 = vpop.permute.xlu0 %582
    %v585 = vsel %vm300, %v580, 0
    %v588 = vsel %vm328, %v583, 0
    %590 = vmatpush.bf16.msra.mxu0 0
    %591 = vmatpush.bf16.msra.mxu0 0
    %592 = vmatpush.bf16.msra.mxu0 0
    %593 = vmatpush.bf16.msra.mxu0 0
    %594 = vmatpush.bf16.msra.mxu0 0
    %595 = vmatpush.bf16.msra.mxu0 0
    %596 = vmatpush.bf16.msra.mxu0 0
    %597 = vmatpush.bf16.msra.mxu0 %v588
    %598 = vmatmul.bf16.gmra.mxu0 %v585
    %v599 = vpop.f32.mrf.mxu0
    %v600 = vadd.f32 0.0, %v599
    %v601 = vpop.f32.mrf.mxu0
    %602 = vdwg.mxu0
    %603 = vrot.lane.b32.xlu0 %v477, 96
    %v604 = vpop.permute.xlu0 %603
    %v606 = vsel %vm300, %v581, 0
    %v609 = vsel %vm328, %v604, 0
    %611 = vmatpush.bf16.msra.mxu0 0
    %612 = vmatpush.bf16.msra.mxu0 0
    %613 = vmatpush.bf16.msra.mxu0 0
    %614 = vmatpush.bf16.msra.mxu0 0
    %615 = vmatpush.bf16.msra.mxu0 0
    %616 = vmatpush.bf16.msra.mxu0 0
    %617 = vmatpush.bf16.msra.mxu0 0
    %618 = vmatpush.bf16.msra.mxu0 %v609
    %619 = vmatmul.bf16.gmra.mxu0 %v606
    %v620 = vpop.f32.mrf.mxu0
    %v621 = vadd.f32 0.0, %v620
    %v622 = vpop.f32.mrf.mxu0
    %623 = vdwg.mxu0
    %v624 = vpack.c.bf16 %v600, %v600
    %v625 = vpack.c.bf16 %v621, %v621
    %628 = vrot.lane.b32.xlu0 %v624, 32
    %v629 = vpop.permute.xlu0 %628
    %630 = vrot.lane.b32.xlu0 %v625, 32
    %v631 = vpop.permute.xlu0 %630
    %vm634 = vcmask 388352
    %635 = vst.msk [vmem:[#allocation2] sm:$0xf] %vm634, %v629
    %636 = vst.msk [vmem:[#allocation2 + $0x4] sm:$0xf] %vm634, %v631
    %637 = vrot.lane.b32.xlu0 %v371, 80
    %v638 = vpop.permute.xlu0 %637
    %639 = vrot.lane.b32.xlu0 %v376, 80
    %v640 = vpop.permute.xlu0 %639
    %v642 = vsel %vm261, %v638, 0
    %v645 = vsel %vm261, %v640, 0
    %647 = vmatpush.bf16.xpose.msra.mxu0 0
    %648 = vmatpush.bf16.xpose.msra.mxu0 0
    %649 = vmatpush.bf16.xpose.msra.mxu0 0
    %650 = vmatpush.bf16.xpose.msra.mxu0 0
    %651 = vmatpush.bf16.xpose.msra.mxu0 0
    %652 = vmatpush.bf16.xpose.msra.mxu0 0
    %653 = vmatpush.bf16.xpose.msra.mxu0 0
    %654 = vmatpush.bf16.xpose.msra.mxu0 %v645
    %655 = vmatmul.bf16.gmra.mxu0 %v642
    %v656 = vpop.f32.mrf.mxu0
    %v657 = vadd.f32 0.0, %v656
    %v658 = vpop.f32.mrf.mxu0
    %659 = vdwg.mxu0
    %660 = vrot.lane.b32.xlu0 %v400, 80
    %v661 = vpop.permute.xlu0 %660
    %662 = vrot.lane.b32.xlu0 %v405, 80
    %v663 = vpop.permute.xlu0 %662
    %v665 = vsel %vm261, %v661, 0
    %v668 = vsel %vm261, %v663, 0
    %670 = vmatpush.bf16.xpose.msra.mxu0 0
    %671 = vmatpush.bf16.xpose.msra.mxu0 0
    %672 = vmatpush.bf16.xpose.msra.mxu0 0
    %673 = vmatpush.bf16.xpose.msra.mxu0 0
    %674 = vmatpush.bf16.xpose.msra.mxu0 0
    %675 = vmatpush.bf16.xpose.msra.mxu0 0
    %676 = vmatpush.bf16.xpose.msra.mxu0 0
    %677 = vmatpush.bf16.xpose.msra.mxu0 %v668
    %678 = vmatmul.bf16.gmra.mxu0 %v665
    %v679 = vpop.f32.mrf.mxu0
    %v680 = vadd.f32 0.0, %v679
    %v681 = vpop.f32.mrf.mxu0
    %682 = vdwg.mxu0
    %v683 = vsel %vm300, %v657, -inf
    %684 = vmax.xlane.f32.xlu0 %v683
    %v685 = vpop.xlane.xlu0 %684
    %v686 = vsel %vm300, %v680, -inf
    %687 = vmax.xlane.f32.xlu0 %v686
    %v688 = vpop.xlane.xlu0 %687
    %v689 = vsub.f32 %v657, %v685
    %v690 = vsub.f32 %v680, %v688
    %v691 = vmul.f32 %v689, 1.442695
    %v692 = vpow.pop %v691
    %v693 = vmul.f32 %v690, 1.442695
    %v694 = vpow.pop %v693
    %v695 = vsel %vm300, %v692, 0.0
    %696 = vadd.xlane.f32.xlu0 %v695
    %v697 = vpop.xlane.xlu0 %696
    %v698 = vsel %vm300, %v694, 0.0
    %699 = vadd.xlane.f32.xlu0 %v698
    %v700 = vpop.xlane.xlu0 %699
    %v701 = vrcp.pop %v697
    %v702 = vrcp.pop %v700
    %v703 = vmul.f32 %v692, %v701
    %v704 = vmul.f32 %v694, %v702
    %v705 = vpack.c.bf16 %v703, %v703
    %v706 = vpack.c.bf16 %v704, %v704
    %707 = vrot.lane.b32.xlu0 %v453, 80
    %v708 = vpop.permute.xlu0 %707
    %v710 = vsel %vm300, %v705, 0
    %v713 = vsel %vm328, %v708, 0
    %715 = vmatpush.bf16.msra.mxu0 0
    %716 = vmatpush.bf16.msra.mxu0 0
    %717 = vmatpush.bf16.msra.mxu0 0
    %718 = vmatpush.bf16.msra.mxu0 0
    %719 = vmatpush.bf16.msra.mxu0 0
    %720 = vmatpush.bf16.msra.mxu0 0
    %721 = vmatpush.bf16.msra.mxu0 0
    %722 = vmatpush.bf16.msra.mxu0 %v713
    %723 = vmatmul.bf16.gmra.mxu0 %v710
    %v724 = vpop.f32.mrf.mxu0
    %v725 = vadd.f32 0.0, %v724
    %v726 = vpop.f32.mrf.mxu0
    %727 = vdwg.mxu0
    %728 = vrot.lane.b32.xlu0 %v477, 80
    %v729 = vpop.permute.xlu0 %728
    %v731 = vsel %vm300, %v706, 0
    %v734 = vsel %vm328, %v729, 0
    %736 = vmatpush.bf16.msra.mxu0 0
    %737 = vmatpush.bf16.msra.mxu0 0
    %738 = vmatpush.bf16.msra.mxu0 0
    %739 = vmatpush.bf16.msra.mxu0 0
    %740 = vmatpush.bf16.msra.mxu0 0
    %741 = vmatpush.bf16.msra.mxu0 0
    %742 = vmatpush.bf16.msra.mxu0 0
    %743 = vmatpush.bf16.msra.mxu0 %v734
    %744 = vmatmul.bf16.gmra.mxu0 %v731
    %v745 = vpop.f32.mrf.mxu0
    %v746 = vadd.f32 0.0, %v745
    %v747 = vpop.f32.mrf.mxu0
    %748 = vdwg.mxu0
    %v749 = vpack.c.bf16 %v725, %v725
    %v750 = vpack.c.bf16 %v746, %v746
    %753 = vrot.lane.b32.xlu0 %v749, 48
    %v754 = vpop.permute.xlu0 %753
    %755 = vrot.lane.b32.xlu0 %v750, 48
    %v756 = vpop.permute.xlu0 %755
    %vm759 = vcmask 519552
    %760 = vst.msk [vmem:[#allocation2] sm:$0xf] %vm759, %v754
    %761 = vst.msk [vmem:[#allocation2 + $0x4] sm:$0xf] %vm759, %v756
    %762 = vrot.lane.b32.xlu0 %v371, 64
    %v763 = vpop.permute.xlu0 %762
    %764 = vrot.lane.b32.xlu0 %v376, 64
    %v765 = vpop.permute.xlu0 %764
    %v767 = vsel %vm261, %v763, 0
    %v770 = vsel %vm261, %v765, 0
    %772 = vmatpush.bf16.xpose.msra.mxu0 0
    %773 = vmatpush.bf16.xpose.msra.mxu0 0
    %774 = vmatpush.bf16.xpose.msra.mxu0 0
    %775 = vmatpush.bf16.xpose.msra.mxu0 0
    %776 = vmatpush.bf16.xpose.msra.mxu0 0
    %777 = vmatpush.bf16.xpose.msra.mxu0 0
    %778 = vmatpush.bf16.xpose.msra.mxu0 0
    %779 = vmatpush.bf16.xpose.msra.mxu0 %v770
    %780 = vmatmul.bf16.gmra.mxu0 %v767
    %v781 = vpop.f32.mrf.mxu0
    %v782 = vadd.f32 0.0, %v781
    %v783 = vpop.f32.mrf.mxu0
    %784 = vdwg.mxu0
    %785 = vrot.lane.b32.xlu0 %v400, 64
    %v786 = vpop.permute.xlu0 %785
    %787 = vrot.lane.b32.xlu0 %v405, 64
    %v788 = vpop.permute.xlu0 %787
    %v790 = vsel %vm261, %v786, 0
    %v793 = vsel %vm261, %v788, 0
    %795 = vmatpush.bf16.xpose.msra.mxu0 0
    %796 = vmatpush.bf16.xpose.msra.mxu0 0
    %797 = vmatpush.bf16.xpose.msra.mxu0 0
    %798 = vmatpush.bf16.xpose.msra.mxu0 0
    %799 = vmatpush.bf16.xpose.msra.mxu0 0
    %800 = vmatpush.bf16.xpose.msra.mxu0 0
    %801 = vmatpush.bf16.xpose.msra.mxu0 0
    %802 = vmatpush.bf16.xpose.msra.mxu0 %v793
    %803 = vmatmul.bf16.gmra.mxu0 %v790
    %v804 = vpop.f32.mrf.mxu0
    %v805 = vadd.f32 0.0, %v804
    %v806 = vpop.f32.mrf.mxu0
    %807 = vdwg.mxu0
    %v808 = vsel %vm300, %v782, -inf
    %809 = vmax.xlane.f32.xlu0 %v808
    %v810 = vpop.xlane.xlu0 %809
    %v811 = vsel %vm300, %v805, -inf
    %812 = vmax.xlane.f32.xlu0 %v811
    %v813 = vpop.xlane.xlu0 %812
    %v814 = vsub.f32 %v782, %v810
    %v815 = vsub.f32 %v805, %v813
    %v816 = vmul.f32 %v814, 1.442695
    %v817 = vpow.pop %v816
    %v818 = vmul.f32 %v815, 1.442695
    %v819 = vpow.pop %v818
    %v820 = vsel %vm300, %v817, 0.0
    %821 = vadd.xlane.f32.xlu0 %v820
    %v822 = vpop.xlane.xlu0 %821
    %v823 = vsel %vm300, %v819, 0.0
    %824 = vadd.xlane.f32.xlu0 %v823
    %v825 = vpop.xlane.xlu0 %824
    %v826 = vrcp.pop %v822
    %v827 = vrcp.pop %v825
    %v828 = vmul.f32 %v817, %v826
    %v829 = vmul.f32 %v819, %v827
    %v830 = vpack.c.bf16 %v828, %v828
    %v831 = vpack.c.bf16 %v829, %v829
    %832 = vrot.lane.b32.xlu0 %v453, 64
    %v833 = vpop.permute.xlu0 %832
    %v835 = vsel %vm300, %v830, 0
    %v838 = vsel %vm328, %v833, 0
    %840 = vmatpush.bf16.msra.mxu0 0
    %841 = vmatpush.bf16.msra.mxu0 0
    %842 = vmatpush.bf16.msra.mxu0 0
    %843 = vmatpush.bf16.msra.mxu0 0
    %844 = vmatpush.bf16.msra.mxu0 0
    %845 = vmatpush.bf16.msra.mxu0 0
    %846 = vmatpush.bf16.msra.mxu0 0
    %847 = vmatpush.bf16.msra.mxu0 %v838
    %848 = vmatmul.bf16.gmra.mxu0 %v835
    %v849 = vpop.f32.mrf.mxu0
    %v850 = vadd.f32 0.0, %v849
    %v851 = vpop.f32.mrf.mxu0
    %852 = vdwg.mxu0
    %853 = vrot.lane.b32.xlu0 %v477, 64
    %v854 = vpop.permute.xlu0 %853
    %v856 = vsel %vm300, %v831, 0
    %v859 = vsel %vm328, %v854, 0
    %861 = vmatpush.bf16.msra.mxu0 0
    %862 = vmatpush.bf16.msra.mxu0 0
    %863 = vmatpush.bf16.msra.mxu0 0
    %864 = vmatpush.bf16.msra.mxu0 0
    %865 = vmatpush.bf16.msra.mxu0 0
    %866 = vmatpush.bf16.msra.mxu0 0
    %867 = vmatpush.bf16.msra.mxu0 0
    %868 = vmatpush.bf16.msra.mxu0 %v859
    %869 = vmatmul.bf16.gmra.mxu0 %v856
    %v870 = vpop.f32.mrf.mxu0
    %v871 = vadd.f32 0.0, %v870
    %v872 = vpop.f32.mrf.mxu0
    %873 = vdwg.mxu0
    %v874 = vpack.c.bf16 %v850, %v850
    %v875 = vpack.c.bf16 %v871, %v871
    %878 = vrot.lane.b32.xlu0 %v874, 64
    %v879 = vpop.permute.xlu0 %878
    %880 = vrot.lane.b32.xlu0 %v875, 64
    %v881 = vpop.permute.xlu0 %880
    %vm884 = vcmask 650752
    %885 = vst.msk [vmem:[#allocation2] sm:$0xf] %vm884, %v879
    %886 = vst.msk [vmem:[#allocation2 + $0x4] sm:$0xf] %vm884, %v881
    %887 = vrot.lane.b32.xlu0 %v371, 48
    %v888 = vpop.permute.xlu0 %887
    %889 = vrot.lane.b32.xlu0 %v376, 48
    %v890 = vpop.permute.xlu0 %889
    %v892 = vsel %vm261, %v888, 0
    %v895 = vsel %vm261, %v890, 0
    %897 = vmatpush.bf16.xpose.msra.mxu0 0
    %898 = vmatpush.bf16.xpose.msra.mxu0 0
    %899 = vmatpush.bf16.xpose.msra.mxu0 0
    %900 = vmatpush.bf16.xpose.msra.mxu0 0
    %901 = vmatpush.bf16.xpose.msra.mxu0 0
    %902 = vmatpush.bf16.xpose.msra.mxu0 0
    %903 = vmatpush.bf16.xpose.msra.mxu0 0
    %904 = vmatpush.bf16.xpose.msra.mxu0 %v895
    %905 = vmatmul.bf16.gmra.mxu0 %v892
    %v906 = vpop.f32.mrf.mxu0
    %v907 = vadd.f32 0.0, %v906
    %v908 = vpop.f32.mrf.mxu0
    %909 = vdwg.mxu0
    %910 = vrot.lane.b32.xlu0 %v400, 48
    %v911 = vpop.permute.xlu0 %910
    %912 = vrot.lane.b32.xlu0 %v405, 48
    %v913 = vpop.permute.xlu0 %912
    %v915 = vsel %vm261, %v911, 0
    %v918 = vsel %vm261, %v913, 0
    %920 = vmatpush.bf16.xpose.msra.mxu0 0
    %921 = vmatpush.bf16.xpose.msra.mxu0 0
    %922 = vmatpush.bf16.xpose.msra.mxu0 0
    %923 = vmatpush.bf16.xpose.msra.mxu0 0
    %924 = vmatpush.bf16.xpose.msra.mxu0 0
    %925 = vmatpush.bf16.xpose.msra.mxu0 0
    %926 = vmatpush.bf16.xpose.msra.mxu0 0
    %927 = vmatpush.bf16.xpose.msra.mxu0 %v918
    %928 = vmatmul.bf16.gmra.mxu0 %v915
    %v929 = vpop.f32.mrf.mxu0
    %v930 = vadd.f32 0.0, %v929
    %v931 = vpop.f32.mrf.mxu0
    %932 = vdwg.mxu0
    %v933 = vsel %vm300, %v907, -inf
    %934 = vmax.xlane.f32.xlu0 %v933
    %v935 = vpop.xlane.xlu0 %934
    %v936 = vsel %vm300, %v930, -inf
    %937 = vmax.xlane.f32.xlu0 %v936
    %v938 = vpop.xlane.xlu0 %937
    %v939 = vsub.f32 %v907, %v935
    %v940 = vsub.f32 %v930, %v938
    %v941 = vmul.f32 %v939, 1.442695
    %v942 = vpow.pop %v941
    %v943 = vmul.f32 %v940, 1.442695
    %v944 = vpow.pop %v943
    %v945 = vsel %vm300, %v942, 0.0
    %946 = vadd.xlane.f32.xlu0 %v945
    %v947 = vpop.xlane.xlu0 %946
    %v948 = vsel %vm300, %v944, 0.0
    %949 = vadd.xlane.f32.xlu0 %v948
    %v950 = vpop.xlane.xlu0 %949
    %v951 = vrcp.pop %v947
    %v952 = vrcp.pop %v950
    %v953 = vmul.f32 %v942, %v951
    %v954 = vmul.f32 %v944, %v952
    %v955 = vpack.c.bf16 %v953, %v953
    %v956 = vpack.c.bf16 %v954, %v954
    %957 = vrot.lane.b32.xlu0 %v453, 48
    %v958 = vpop.permute.xlu0 %957
    %v960 = vsel %vm300, %v955, 0
    %v963 = vsel %vm328, %v958, 0
    %965 = vmatpush.bf16.msra.mxu0 0
    %966 = vmatpush.bf16.msra.mxu0 0
    %967 = vmatpush.bf16.msra.mxu0 0
    %968 = vmatpush.bf16.msra.mxu0 0
    %969 = vmatpush.bf16.msra.mxu0 0
    %970 = vmatpush.bf16.msra.mxu0 0
    %971 = vmatpush.bf16.msra.mxu0 0
    %972 = vmatpush.bf16.msra.mxu0 %v963
    %973 = vmatmul.bf16.gmra.mxu0 %v960
    %v974 = vpop.f32.mrf.mxu0
    %v975 = vadd.f32 0.0, %v974
    %v976 = vpop.f32.mrf.mxu0
    %977 = vdwg.mxu0
    %978 = vrot.lane.b32.xlu0 %v477, 48
    %v979 = vpop.permute.xlu0 %978
    %v981 = vsel %vm300, %v956, 0
    %v984 = vsel %vm328, %v979, 0
    %986 = vmatpush.bf16.msra.mxu0 0
    %987 = vmatpush.bf16.msra.mxu0 0
    %988 = vmatpush.bf16.msra.mxu0 0
    %989 = vmatpush.bf16.msra.mxu0 0
    %990 = vmatpush.bf16.msra.mxu0 0
    %991 = vmatpush.bf16.msra.mxu0 0
    %992 = vmatpush.bf16.msra.mxu0 0
    %993 = vmatpush.bf16.msra.mxu0 %v984
    %994 = vmatmul.bf16.gmra.mxu0 %v981
    %v995 = vpop.f32.mrf.mxu0
    %v996 = vadd.f32 0.0, %v995
    %v997 = vpop.f32.mrf.mxu0
    %998 = vdwg.mxu0
    %v999 = vpack.c.bf16 %v975, %v975
    %v1000 = vpack.c.bf16 %v996, %v996
    %1003 = vrot.lane.b32.xlu0 %v999, 80
    %v1004 = vpop.permute.xlu0 %1003
    %1005 = vrot.lane.b32.xlu0 %v1000, 80
    %v1006 = vpop.permute.xlu0 %1005
    %vm1009 = vcmask 781952
    %1010 = vst.msk [vmem:[#allocation2] sm:$0xf] %vm1009, %v1004
    %1011 = vst.msk [vmem:[#allocation2 + $0x4] sm:$0xf] %vm1009, %v1006
    %1012 = vrot.lane.b32.xlu0 %v371, 32
    %v1013 = vpop.permute.xlu0 %1012
    %1014 = vrot.lane.b32.xlu0 %v376, 32
    %v1015 = vpop.permute.xlu0 %1014
    %v1017 = vsel %vm261, %v1013, 0
    %v1020 = vsel %vm261, %v1015, 0
    %1022 = vmatpush.bf16.xpose.msra.mxu0 0
    %1023 = vmatpush.bf16.xpose.msra.mxu0 0
    %1024 = vmatpush.bf16.xpose.msra.mxu0 0
    %1025 = vmatpush.bf16.xpose.msra.mxu0 0
    %1026 = vmatpush.bf16.xpose.msra.mxu0 0
    %1027 = vmatpush.bf16.xpose.msra.mxu0 0
    %1028 = vmatpush.bf16.xpose.msra.mxu0 0
    %1029 = vmatpush.bf16.xpose.msra.mxu0 %v1020
    %1030 = vmatmul.bf16.gmra.mxu0 %v1017
    %v1031 = vpop.f32.mrf.mxu0
    %v1032 = vadd.f32 0.0, %v1031
    %v1033 = vpop.f32.mrf.mxu0
    %1034 = vdwg.mxu0
    %1035 = vrot.lane.b32.xlu0 %v400, 32
    %v1036 = vpop.permute.xlu0 %1035
    %1037 = vrot.lane.b32.xlu0 %v405, 32
    %v1038 = vpop.permute.xlu0 %1037
    %v1040 = vsel %vm261, %v1036, 0
    %v1043 = vsel %vm261, %v1038, 0
    %1045 = vmatpush.bf16.xpose.msra.mxu0 0
    %1046 = vmatpush.bf16.xpose.msra.mxu0 0
    %1047 = vmatpush.bf16.xpose.msra.mxu0 0
    %1048 = vmatpush.bf16.xpose.msra.mxu0 0
    %1049 = vmatpush.bf16.xpose.msra.mxu0 0
    %1050 = vmatpush.bf16.xpose.msra.mxu0 0
    %1051 = vmatpush.bf16.xpose.msra.mxu0 0
    %1052 = vmatpush.bf16.xpose.msra.mxu0 %v1043
    %1053 = vmatmul.bf16.gmra.mxu0 %v1040
    %v1054 = vpop.f32.mrf.mxu0
    %v1055 = vadd.f32 0.0, %v1054
    %v1056 = vpop.f32.mrf.mxu0
    %1057 = vdwg.mxu0
    %v1058 = vsel %vm300, %v1032, -inf
    %1059 = vmax.xlane.f32.xlu0 %v1058
    %v1060 = vpop.xlane.xlu0 %1059
    %v1061 = vsel %vm300, %v1055, -inf
    %1062 = vmax.xlane.f32.xlu0 %v1061
    %v1063 = vpop.xlane.xlu0 %1062
    %v1064 = vsub.f32 %v1032, %v1060
    %v1065 = vsub.f32 %v1055, %v1063
    %v1066 = vmul.f32 %v1064, 1.442695
    %v1067 = vpow.pop %v1066
    %v1068 = vmul.f32 %v1065, 1.442695
    %v1069 = vpow.pop %v1068
    %v1070 = vsel %vm300, %v1067, 0.0
    %1071 = vadd.xlane.f32.xlu0 %v1070
    %v1072 = vpop.xlane.xlu0 %1071
    %v1073 = vsel %vm300, %v1069, 0.0
    %1074 = vadd.xlane.f32.xlu0 %v1073
    %v1075 = vpop.xlane.xlu0 %1074
    %v1076 = vrcp.pop %v1072
    %v1077 = vrcp.pop %v1075
    %v1078 = vmul.f32 %v1067, %v1076
    %v1079 = vmul.f32 %v1069, %v1077
    %v1080 = vpack.c.bf16 %v1078, %v1078
    %v1081 = vpack.c.bf16 %v1079, %v1079
    %1082 = vrot.lane.b32.xlu0 %v453, 32
    %v1083 = vpop.permute.xlu0 %1082
    %v1085 = vsel %vm300, %v1080, 0
    %v1088 = vsel %vm328, %v1083, 0
    %1090 = vmatpush.bf16.msra.mxu0 0
    %1091 = vmatpush.bf16.msra.mxu0 0
    %1092 = vmatpush.bf16.msra.mxu0 0
    %1093 = vmatpush.bf16.msra.mxu0 0
    %1094 = vmatpush.bf16.msra.mxu0 0
    %1095 = vmatpush.bf16.msra.mxu0 0
    %1096 = vmatpush.bf16.msra.mxu0 0
    %1097 = vmatpush.bf16.msra.mxu0 %v1088
    %1098 = vmatmul.bf16.gmra.mxu0 %v1085
    %v1099 = vpop.f32.mrf.mxu0
    %v1100 = vadd.f32 0.0, %v1099
    %v1101 = vpop.f32.mrf.mxu0
    %1102 = vdwg.mxu0
    %1103 = vrot.lane.b32.xlu0 %v477, 32
    %v1104 = vpop.permute.xlu0 %1103
    %v1106 = vsel %vm300, %v1081, 0
    %v1109 = vsel %vm328, %v1104, 0
    %1111 = vmatpush.bf16.msra.mxu0 0
    %1112 = vmatpush.bf16.msra.mxu0 0
    %1113 = vmatpush.bf16.msra.mxu0 0
    %1114 = vmatpush.bf16.msra.mxu0 0
    %1115 = vmatpush.bf16.msra.mxu0 0
    %1116 = vmatpush.bf16.msra.mxu0 0
    %1117 = vmatpush.bf16.msra.mxu0 0
    %1118 = vmatpush.bf16.msra.mxu0 %v1109
    %1119 = vmatmul.bf16.gmra.mxu0 %v1106
    %v1120 = vpop.f32.mrf.mxu0
    %v1121 = vadd.f32 0.0, %v1120
    %v1122 = vpop.f32.mrf.mxu0
    %1123 = vdwg.mxu0
    %v1124 = vpack.c.bf16 %v1100, %v1100
    %v1125 = vpack.c.bf16 %v1121, %v1121
    %1128 = vrot.lane.b32.xlu0 %v1124, 96
    %v1129 = vpop.permute.xlu0 %1128
    %1130 = vrot.lane.b32.xlu0 %v1125, 96
    %v1131 = vpop.permute.xlu0 %1130
    %vm1134 = vcmask 913152
    %1135 = vst.msk [vmem:[#allocation2] sm:$0xf] %vm1134, %v1129
    %1136 = vst.msk [vmem:[#allocation2 + $0x4] sm:$0xf] %vm1134, %v1131
    %1137 = vrot.lane.b32.xlu0 %v371, 16
    %v1138 = vpop.permute.xlu0 %1137
    %1139 = vrot.lane.b32.xlu0 %v376, 16
    %v1140 = vpop.permute.xlu0 %1139
    %v1142 = vsel %vm261, %v1138, 0
    %v1145 = vsel %vm261, %v1140, 0
    %1147 = vmatpush.bf16.xpose.msra.mxu0 0
    %1148 = vmatpush.bf16.xpose.msra.mxu0 0
    %1149 = vmatpush.bf16.xpose.msra.mxu0 0
    %1150 = vmatpush.bf16.xpose.msra.mxu0 0
    %1151 = vmatpush.bf16.xpose.msra.mxu0 0
    %1152 = vmatpush.bf16.xpose.msra.mxu0 0
    %1153 = vmatpush.bf16.xpose.msra.mxu0 0
    %1154 = vmatpush.bf16.xpose.msra.mxu0 %v1145
    %1155 = vmatmul.bf16.gmra.mxu0 %v1142
    %v1156 = vpop.f32.mrf.mxu0
    %v1157 = vadd.f32 0.0, %v1156
    %v1158 = vpop.f32.mrf.mxu0
    %1159 = vdwg.mxu0
    %1160 = vrot.lane.b32.xlu0 %v400, 16
    %v1161 = vpop.permute.xlu0 %1160
    %1162 = vrot.lane.b32.xlu0 %v405, 16
    %v1163 = vpop.permute.xlu0 %1162
    %v1165 = vsel %vm261, %v1161, 0
    %v1168 = vsel %vm261, %v1163, 0
    %1170 = vmatpush.bf16.xpose.msra.mxu0 0
    %1171 = vmatpush.bf16.xpose.msra.mxu0 0
    %1172 = vmatpush.bf16.xpose.msra.mxu0 0
    %1173 = vmatpush.bf16.xpose.msra.mxu0 0
    %1174 = vmatpush.bf16.xpose.msra.mxu0 0
    %1175 = vmatpush.bf16.xpose.msra.mxu0 0
    %1176 = vmatpush.bf16.xpose.msra.mxu0 0
    %1177 = vmatpush.bf16.xpose.msra.mxu0 %v1168
    %1178 = vmatmul.bf16.gmra.mxu0 %v1165
    %v1179 = vpop.f32.mrf.mxu0
    %v1180 = vadd.f32 0.0, %v1179
    %v1181 = vpop.f32.mrf.mxu0
    %1182 = vdwg.mxu0
    %v1183 = vsel %vm300, %v1157, -inf
    %1184 = vmax.xlane.f32.xlu0 %v1183
    %v1185 = vpop.xlane.xlu0 %1184
    %v1186 = vsel %vm300, %v1180, -inf
    %1187 = vmax.xlane.f32.xlu0 %v1186
    %v1188 = vpop.xlane.xlu0 %1187
    %v1189 = vsub.f32 %v1157, %v1185
    %v1190 = vsub.f32 %v1180, %v1188
    %v1191 = vmul.f32 %v1189, 1.442695
    %v1192 = vpow.pop %v1191
    %v1193 = vmul.f32 %v1190, 1.442695
    %v1194 = vpow.pop %v1193
    %v1195 = vsel %vm300, %v1192, 0.0
    %1196 = vadd.xlane.f32.xlu0 %v1195
    %v1197 = vpop.xlane.xlu0 %1196
    %v1198 = vsel %vm300, %v1194, 0.0
    %1199 = vadd.xlane.f32.xlu0 %v1198
    %v1200 = vpop.xlane.xlu0 %1199
    %v1201 = vrcp.pop %v1197
    %v1202 = vrcp.pop %v1200
    %v1203 = vmul.f32 %v1192, %v1201
    %v1204 = vmul.f32 %v1194, %v1202
    %v1205 = vpack.c.bf16 %v1203, %v1203
    %v1206 = vpack.c.bf16 %v1204, %v1204
    %1207 = vrot.lane.b32.xlu0 %v453, 16
    %v1208 = vpop.permute.xlu0 %1207
    %v1210 = vsel %vm300, %v1205, 0
    %v1213 = vsel %vm328, %v1208, 0
    %1215 = vmatpush.bf16.msra.mxu0 0
    %1216 = vmatpush.bf16.msra.mxu0 0
    %1217 = vmatpush.bf16.msra.mxu0 0
    %1218 = vmatpush.bf16.msra.mxu0 0
    %1219 = vmatpush.bf16.msra.mxu0 0
    %1220 = vmatpush.bf16.msra.mxu0 0
    %1221 = vmatpush.bf16.msra.mxu0 0
    %1222 = vmatpush.bf16.msra.mxu0 %v1213
    %1223 = vmatmul.bf16.gmra.mxu0 %v1210
    %v1224 = vpop.f32.mrf.mxu0
    %v1225 = vadd.f32 0.0, %v1224
    %v1226 = vpop.f32.mrf.mxu0
    %1227 = vdwg.mxu0
    %1228 = vrot.lane.b32.xlu0 %v477, 16
    %v1229 = vpop.permute.xlu0 %1228
    %v1231 = vsel %vm300, %v1206, 0
    %v1234 = vsel %vm328, %v1229, 0
    %1236 = vmatpush.bf16.msra.mxu0 0
    %1237 = vmatpush.bf16.msra.mxu0 0
    %1238 = vmatpush.bf16.msra.mxu0 0
    %1239 = vmatpush.bf16.msra.mxu0 0
    %1240 = vmatpush.bf16.msra.mxu0 0
    %1241 = vmatpush.bf16.msra.mxu0 0
    %1242 = vmatpush.bf16.msra.mxu0 0
    %1243 = vmatpush.bf16.msra.mxu0 %v1234
    %1244 = vmatmul.bf16.gmra.mxu0 %v1231
    %v1245 = vpop.f32.mrf.mxu0
    %v1246 = vadd.f32 0.0, %v1245
    %v1247 = vpop.f32.mrf.mxu0
    %1248 = vdwg.mxu0
    %v1249 = vpack.c.bf16 %v1225, %v1225
    %v1250 = vpack.c.bf16 %v1246, %v1246
    %1253 = vrot.lane.b32.xlu0 %v1249, 112
    %v1254 = vpop.permute.xlu0 %1253
    %1255 = vrot.lane.b32.xlu0 %v1250, 112
    %v1256 = vpop.permute.xlu0 %1255
    %vm1259 = vcmask 1044352
    %1260 = vst.msk [vmem:[#allocation2] sm:$0xf] %vm1259, %v1254
    %1261 = vst.msk [vmem:[#allocation2 + $0x4] sm:$0xf] %vm1259, %v1256
    %v1262 = vld [vmem:[#allocation2] sm:$0xf]
    %v1263 = vld [vmem:[#allocation2 + $0x4] sm:$0xf]
    %v1264 = vld [vmem:[%s3] sm:$0xf]
    %v1265 = vld [vmem:[%s3 + $0x4] sm:$0xf]
    %v1266 = vld [vmem:[%s3 + $0x8] sm:$0xf]
    %v1267 = vld [vmem:[%s3 + $0xc] sm:$0xf]
    %v1268 = vld [vmem:[%s3 + $0x10] sm:$0xf]
    %v1269 = vld [vmem:[%s3 + $0x14] sm:$0xf]
    %v1270 = vld [vmem:[%s3 + $0x18] sm:$0xf]
    %v1271 = vld [vmem:[%s3 + $0x1c] sm:$0xf]
    %v1272 = vld [vmem:[%s3 + $0x20] sm:$0xf]
    %v1273 = vld [vmem:[%s3 + $0x24] sm:$0xf]
    %v1274 = vld [vmem:[%s3 + $0x28] sm:$0xf]
    %v1275 = vld [vmem:[%s3 + $0x2c] sm:$0xf]
    %v1276 = vld [vmem:[%s3 + $0x30] sm:$0xf]
    %v1277 = vld [vmem:[%s3 + $0x34] sm:$0xf]
    %v1278 = vld [vmem:[%s3 + $0x38] sm:$0xf]
    %v1279 = vld [vmem:[%s3 + $0x3c] sm:$0xf]
    %v1280 = vld [vmem:[%s4] sm:$0x1]
    %v1282 = vperm.slane %v1280, 0
    %v1286 = vunpack.c.l.b16 %v1262
    %v1287 = vunpack.c.l.b16 %v1263
    %v1288 = vpack.c.b16 %v1287, %v1286
    %v1306 = vunpack.c.l.b16 %v1264
    %v1307 = vunpack.c.l.b16 %v1265
    %v1308 = vunpack.c.l.b16 %v1266
    %v1309 = vunpack.c.l.b16 %v1267
    %v1310 = vunpack.c.l.b16 %v1268
    %v1311 = vunpack.c.l.b16 %v1269
    %v1312 = vunpack.c.l.b16 %v1270
    %v1313 = vunpack.c.l.b16 %v1271
    %v1314 = vunpack.c.l.b16 %v1272
    %v1315 = vunpack.c.l.b16 %v1273
    %v1316 = vunpack.c.l.b16 %v1274
    %v1317 = vunpack.c.l.b16 %v1275
    %v1318 = vunpack.c.l.b16 %v1276
    %v1319 = vunpack.c.l.b16 %v1277
    %v1320 = vunpack.c.l.b16 %v1278
    %v1321 = vunpack.c.l.b16 %v1279
    %v1322 = vpack.c.b16 %v1307, %v1306
    %v1323 = vpack.c.b16 %v1309, %v1308
    %v1324 = vpack.c.b16 %v1311, %v1310
    %v1325 = vpack.c.b16 %v1313, %v1312
    %v1326 = vpack.c.b16 %v1315, %v1314
    %v1327 = vpack.c.b16 %v1317, %v1316
    %v1328 = vpack.c.b16 %v1319, %v1318
    %v1329 = vpack.c.b16 %v1321, %v1320
    %1338 = vmatpush.bf16.msra.mxu0 %v1329
    %1339 = vmatpush.bf16.msra.mxu0 %v1328
    %1340 = vmatpush.bf16.msra.mxu0 %v1327
    %1341 = vmatpush.bf16.msra.mxu0 %v1326
    %1342 = vmatpush.bf16.msra.mxu0 %v1325
    %1343 = vmatpush.bf16.msra.mxu0 %v1324
    %1344 = vmatpush.bf16.msra.mxu0 %v1323
    %1345 = vmatpush.bf16.msra.mxu0 %v1322
    %1346 = vmatmul.bf16.gmra.mxu0 %v1288
    %v1347 = vpop.f32.mrf.mxu0
    %v1348 = vadd.f32 %v1282, %v1347
    %v1349 = vpop.f32.mrf.mxu0
    %v1350 = vadd.f32 %v1282, %v1349
    %1351 = vdwg.mxu0
    %v1352 = vadd.f32 %v40, %v1348
    %v1353 = vadd.f32 %v41, %v1350
    %v1354 = vld [vmem:[%s5] sm:$0x1]
    %v1355 = vld [vmem:[%s6] sm:$0x1]
    %1356 = vadd.xlane.f32.xlu0 %v1352
    %v1357 = vpop.xlane.xlu0 %1356
    %1358 = vadd.xlane.f32.xlu0 %v1353
    %v1359 = vpop.xlane.xlu0 %1358
    %v1360 = vrcp.pop 128.0
    %v1361 = vmul.f32 128.0, %v1360
    %v1362 = vsub.f32 1.0, %v1361
    %v1363 = vmul.f32 %v1360, %v1362
    %v1364 = vadd.f32 %v1360, %v1363
    %vm1365 = vweird.f32 %v1360
    %v1366 = vsel %vm1365, %v1360, %v1364
    %v1367 = vmul.f32 %v1357, %v1366
    %v1368 = vmul.f32 %v1359, %v1366
    %v1369 = vsub.f32 %v1352, %v1367
    %v1370 = vsub.f32 %v1353, %v1368
    %v1371 = vmul.f32 %v1369, %v1369
    %v1372 = vmul.f32 %v1370, %v1370
    %1373 = vadd.xlane.f32.xlu0 %v1371
    %v1374 = vpop.xlane.xlu0 %1373
    %1375 = vadd.xlane.f32.xlu0 %v1372
    %v1376 = vpop.xlane.xlu0 %1375
    %v1377 = vmul.f32 %v1374, %v1366
    %v1378 = vmul.f32 %v1376, %v1366
    %v1379 = vadd.f32 %v1377, 1e-05
    %v1380 = vadd.f32 %v1378, 1e-05
    %v1381 = vrsqrt.pop %v1379
    %v1382 = vmul.f32 %v1381, %v1379
    %v1383 = vmul.f32 %v1382, %v1381
    %v1384 = vmul.f32 0.5, %v1383
    %v1385 = vsub.f32 1.5, %v1384
    %v1386 = vmul.f32 %v1381, %v1385
    %vm1387 = vweird.f32 %v1379
    %vm1388 = vweird.f32 %v1381
    %vm1389 = vmor %vm1387, %vm1388
    %v1390 = vsel %vm1389, %v1381, %v1386
    %v1391 = vrsqrt.pop %v1380
    %v1392 = vmul.f32 %v1391, %v1380
    %v1393 = vmul.f32 %v1392, %v1391
    %v1394 = vmul.f32 0.5, %v1393
    %v1395 = vsub.f32 1.5, %v1394
    %v1396 = vmul.f32 %v1391, %v1395
    %vm1397 = vweird.f32 %v1380
    %vm1398 = vweird.f32 %v1391
    %vm1399 = vmor %vm1397, %vm1398
    %v1400 = vsel %vm1399, %v1391, %v1396
    %v1401 = vmul.f32 %v1369, %v1390
    %v1402 = vmul.f32 %v1370, %v1400
    %v1404 = vperm.slane %v1354, 0
    %v1406 = vmul.f32 %v1401, %v1404
    %v1407 = vmul.f32 %v1402, %v1404
    %v1409 = vperm.slane %v1355, 0
    %v1411 = vadd.f32 %v1406, %v1409
    %v1412 = vadd.f32 %v1407, %v1409
    %v1413 = vpack.c.bf16 %v1412, %v1411
    %v1414 = vld [vmem:[%s7] sm:$0xf]
    %v1415 = vld [vmem:[%s7 + $0x4] sm:$0xf]
    %v1416 = vld [vmem:[%s7 + $0x8] sm:$0xf]
    %v1417 = vld [vmem:[%s7 + $0xc] sm:$0xf]
    %v1418 = vld [vmem:[%s7 + $0x10] sm:$0xf]
    %v1419 = vld [vmem:[%s7 + $0x14] sm:$0xf]
    %v1420 = vld [vmem:[%s7 + $0x18] sm:$0xf]
    %v1421 = vld [vmem:[%s7 + $0x1c] sm:$0xf]
    %v1422 = vld [vmem:[%s7 + $0x20] sm:$0xf]
    %v1423 = vld [vmem:[%s7 + $0x24] sm:$0xf]
    %v1424 = vld [vmem:[%s7 + $0x28] sm:$0xf]
    %v1425 = vld [vmem:[%s7 + $0x2c] sm:$0xf]
    %v1426 = vld [vmem:[%s7 + $0x30] sm:$0xf]
    %v1427 = vld [vmem:[%s7 + $0x34] sm:$0xf]
    %v1428 = vld [vmem:[%s7 + $0x38] sm:$0xf]
    %v1429 = vld [vmem:[%s7 + $0x3c] sm:$0xf]
    %v1430 = vld [vmem:[%s8] sm:$0x1]
    %v1432 = vperm.slane %v1430, 0
    %v1450 = vunpack.c.l.b16 %v1414
    %v1451 = vunpack.c.l.b16 %v1415
    %v1452 = vunpack.c.l.b16 %v1416
    %v1453 = vunpack.c.l.b16 %v1417
    %v1454 = vunpack.c.l.b16 %v1418
    %v1455 = vunpack.c.l.b16 %v1419
    %v1456 = vunpack.c.l.b16 %v1420
    %v1457 = vunpack.c.l.b16 %v1421
    %v1458 = vunpack.c.l.b16 %v1422
    %v1459 = vunpack.c.l.b16 %v1423
    %v1460 = vunpack.c.l.b16 %v1424
    %v1461 = vunpack.c.l.b16 %v1425
    %v1462 = vunpack.c.l.b16 %v1426
    %v1463 = vunpack.c.l.b16 %v1427
    %v1464 = vunpack.c.l.b16 %v1428
    %v1465 = vunpack.c.l.b16 %v1429
    %v1466 = vpack.c.b16 %v1451, %v1450
    %v1467 = vpack.c.b16 %v1453, %v1452
    %v1468 = vpack.c.b16 %v1455, %v1454
    %v1469 = vpack.c.b16 %v1457, %v1456
    %v1470 = vpack.c.b16 %v1459, %v1458
    %v1471 = vpack.c.b16 %v1461, %v1460
    %v1472 = vpack.c.b16 %v1463, %v1462
    %v1473 = vpack.c.b16 %v1465, %v1464
    %1482 = vmatpush.bf16.msra.mxu0 %v1473
    %1483 = vmatpush.bf16.msra.mxu0 %v1472
    %1484 = vmatpush.bf16.msra.mxu0 %v1471
    %1485 = vmatpush.bf16.msra.mxu0 %v1470
    %1486 = vmatpush.bf16.msra.mxu0 %v1469
    %1487 = vmatpush.bf16.msra.mxu0 %v1468
    %1488 = vmatpush.bf16.msra.mxu0 %v1467
    %1489 = vmatpush.bf16.msra.mxu0 %v1466
    %1490 = vmatmul.bf16.gmra.mxu0 %v1413
    %v1491 = vpop.f32.mrf.mxu0
    %v1492 = vadd.f32 %v1432, %v1491
    %v1493 = vpop.f32.mrf.mxu0
    %v1494 = vadd.f32 %v1432, %v1493
    %1495 = vdwg.mxu0
    %v1496 = vadd.f32 %v1411, %v1492
    %v1497 = vadd.f32 %v1412, %v1494
    %v1498 = vld [vmem:[%s9] sm:$0x1]
    %v1499 = vld [vmem:[%s10] sm:$0x1]
    %1500 = vadd.xlane.f32.xlu0 %v1496
    %v1501 = vpop.xlane.xlu0 %1500
    %1502 = vadd.xlane.f32.xlu0 %v1497
    %v1503 = vpop.xlane.xlu0 %1502
    %v1504 = vmul.f32 %v1501, %v1366
    %v1505 = vmul.f32 %v1503, %v1366
    %v1506 = vsub.f32 %v1496, %v1504
    %v1507 = vsub.f32 %v1497, %v1505
    %v1508 = vmul.f32 %v1506, %v1506
    %v1509 = vmul.f32 %v1507, %v1507
    %1510 = vadd.xlane.f32.xlu0 %v1508
    %v1511 = vpop.xlane.xlu0 %1510
    %1512 = vadd.xlane.f32.xlu0 %v1509
    %v1513 = vpop.xlane.xlu0 %1512
    %v1514 = vmul.f32 %v1511, %v1366
    %v1515 = vmul.f32 %v1513, %v1366
    %v1516 = vadd.f32 %v1514, 1e-05
    %v1517 = vadd.f32 %v1515, 1e-05
    %v1518 = vrsqrt.pop %v1516
    %v1519 = vmul.f32 %v1518, %v1516
    %v1520 = vmul.f32 %v1519, %v1518
    %v1521 = vmul.f32 0.5, %v1520
    %v1522 = vsub.f32 1.5, %v1521
    %v1523 = vmul.f32 %v1518, %v1522
    %vm1524 = vweird.f32 %v1516
    %vm1525 = vweird.f32 %v1518
    %vm1526 = vmor %vm1524, %vm1525
    %v1527 = vsel %vm1526, %v1518, %v1523
    %v1528 = vrsqrt.pop %v1517
    %v1529 = vmul.f32 %v1528, %v1517
    %v1530 = vmul.f32 %v1529, %v1528
    %v1531 = vmul.f32 0.5, %v1530
    %v1532 = vsub.f32 1.5, %v1531
    %v1533 = vmul.f32 %v1528, %v1532
    %vm1534 = vweird.f32 %v1517
    %vm1535 = vweird.f32 %v1528
    %vm1536 = vmor %vm1534, %vm1535
    %v1537 = vsel %vm1536, %v1528, %v1533
    %v1538 = vmul.f32 %v1506, %v1527
    %v1539 = vmul.f32 %v1507, %v1537
    %v1541 = vperm.slane %v1498, 0
    %v1543 = vmul.f32 %v1538, %v1541
    %v1544 = vmul.f32 %v1539, %v1541
    %v1546 = vperm.slane %v1499, 0
    %v1548 = vadd.f32 %v1543, %v1546
    %v1549 = vadd.f32 %v1544, %v1546
    %1550 = vst [vmem:[#allocation3] sm:$0xff] %v1548
    %1551 = vst [vmem:[#allocation3 + $0x8] sm:$0xff] %v1549
    // Predicated region
    $region46: #{simple_decoder_layer.1} parent=1 // pred_check
      _
    $region47: #{simple_decoder_layer.1} parent=1 // pred_check_branch
      %1553 = sbr.rel (0) target = $region49
    $region48: #{simple_decoder_layer.1} parent=1 // pred_region
      %1555 = vsyncadd [#allocation4], 0
      %s1556 = sshll.u32 [#allocation3], 4
      %s1557 = int_to_ptr.vmem [resolvable:$true] %s1556
      %s1558 = sshll.u32 %s11, 4
      %s1559 = int_to_ptr.hbm [resolvable:$true] %s1558
      %1564 = dma.vmem_to_hbm [thread:$0]  %s1557, 256, %s1559, [#allocation4], 128, 128, 8
    $region49: #{simple_decoder_layer.1} parent=1 // pred_fallthru
      _
    // Predicated region
    $region50: #{simple_decoder_layer.1} parent=1 // pred_check
      _
    $region51: #{simple_decoder_layer.1} parent=1 // pred_check_branch
      %1566 = sbr.rel (0) target = $region53
    $region52: #{simple_decoder_layer.1} parent=1 // pred_region
      %1568 = dma.done [#allocation4], 256
    $region53: #{simple_decoder_layer.1} parent=1 // pred_fallthru
      _
    %1569 = vsyncpa [#allocation4], 1

</llo_original>
